<compile_context>
chip_gen: v7x
topology: tpu7x:2x2x1
jax: 0.10.0
libtpu: 0.0.40
codegen_flags: <defaults>
</compile_context>

<pallas_src>
import jax
import jax.numpy as jnp
import numpy as np
from jax import lax
from jax.experimental import pallas as pl
from jax.experimental.pallas import tpu as pltpu

# RoBERTa-base tokenizer constants (the module's only "parameters")
BOS_ID = 0         # <s>
PAD_ID = 1         # <pad>
EOS_ID = 2         # </s>
MASK_ID = 50264    # <mask>  (whole 50265-entry vocab fits in 16 bits)
MAX_PRED = 20      # self.max_pred
SUB = 8            # rows per compute slab (one (8,128)-tile row group)
MAX_SLABS = 8      # at most 64 rows per grid step
OUT_PAD = 128      # lane-dense padding for the 20-wide MLM outputs
SENT = 0x7FFFFFFF  # int32 sentinel key: "not a candidate / already taken"

# TODO(synk): RobertaTokenizer.tokenize / encode_plus (string processing) has no
# Pallas equivalent; token ids are synthesized deterministically in __main__.


def _mlm_kernel(ids_ref, score_ref, out_ids_ref, mlm_ref):
    ns, S, L = ids_ref.shape                 # (slabs, 8, seq_len)
    lane_bits = max(1, (L - 1).bit_length())
    lo_mask = (1 << lane_bits) - 1           # low key bits hold the lane index
    hi_mask = 0x7FFFFFFF ^ lo_mask           # random bits live above the lane

    # hoisted iotas (JAX does not CSE broadcast_in_dim inside loops)
    lane = lax.broadcasted_iota(jnp.int32, (S, L), 1)        # position per lane
    slot = lax.broadcasted_iota(jnp.int32, (S, OUT_PAD), 1)  # MLM slot per lane

    def slab_body(s, carry):
        ids = ids_ref[s]                     # (S, L) int32
        scr = score_ref[s]                   # (S, L) float32 in [0, 1)

        # candidate positions: non-special, non-pad tokens
        cand = (ids != BOS_ID) & (ids != PAD_ID) & (ids != EOS_ID)

        # n_pred = min(max_pred, max(1, round(len(tokens) * 0.5)))
        # (round-half-to-even done in pure int32: h + ((n & 1) & (h & 1)))
        n_tok = jnp.sum(cand.astype(jnp.int32), axis=-1, keepdims=True)
        half = n_tok >> 1
        n_pred = jnp.clip(half + ((n_tok & 1) & (half & 1)), 1, MAX_PRED)

        # integer shuffle keys: uniform [0,1) floats bitcast to int32 keep their
        # ordering; packing the lane into the low bits makes every key unique,
        # so one lane-min gives both the k-th shuffled candidate and its lane.
        ikey = pltpu.bitcast(scr, jnp.int32)
        key0 = jnp.where(cand, (ikey & hi_mask) | lane, SENT)

        def body(k, st):
            key, sel, pos_acc, tok_acc = st
            cur = jnp.min(key, axis=-1, keepdims=True)     # (S,1) k-th smallest
            amin = cur & lo_mask                           # its position (lane)
            onehot = lane == amin                          # (S,L), one True
            tok_at = jnp.sum(jnp.where(onehot, ids, 0),    # token at that pos
                             axis=-1, keepdims=True)
            valid = (k < n_pred) & (cur < SENT)            # (S,1)
            sel = sel | (onehot & valid)
            write = (slot == k) & valid                    # (S,OUT_PAD)
            pos_acc = jnp.where(write, amin, pos_acc)
            tok_acc = jnp.where(write, tok_at, tok_acc)
            key = jnp.where(onehot, SENT, key)
            return key, sel, pos_acc, tok_acc

        init = (key0,
                jnp.zeros((S, L), jnp.bool_),
                jnp.zeros((S, OUT_PAD), jnp.int32),
                jnp.zeros((S, OUT_PAD), jnp.int32))
        _, sel, pos_acc, tok_acc = lax.fori_loop(0, MAX_PRED, body, init,
                                                 unroll=True)

        out_ids_ref[s] = jnp.where(sel, MASK_ID, ids)
        mlm_ref[s] = (pos_acc << 16) | tok_acc             # packed (pos, tok)
        return carry

    # rolled loop over slabs: bounds live ranges of the unrolled loop above
    lax.fori_loop(0, ns, slab_body, 0)


def _slabs_per_step(batch_rows):
    """Slabs (8-row groups) per grid step: as large as possible to amortize the
    ~0.35us per-step overhead, while keeping >= 4 grid steps when the batch
    allows it so v7x's two TensorCores both get work from the parallel axis."""
    ns = 1
    while ns < MAX_SLABS and batch_rows >= SUB * ns * 2 * 4:
        ns *= 2
    return ns


@jax.jit
def features_mlm_forward(ids, attention_mask, shuffle_scores):
    """Returns (masked_ids, attention_mask, mlm_tokens, mlm_pos)."""
    B, L = ids.shape
    assert L <= 32768, "masked position must fit 15 bits for the packed output"
    ids32 = ids.astype(jnp.int32)
    sc = shuffle_scores.astype(jnp.float32)   # expected uniform in [0, 1)

    ns = _slabs_per_step(B)
    step_rows = SUB * ns
    Bp = ((B + step_rows - 1) // step_rows) * step_rows
    if Bp != B:
        pad = Bp - B
        ids32 = jnp.pad(ids32, ((0, pad), (0, 0)), constant_values=PAD_ID)
        sc = jnp.pad(sc, ((0, pad), (0, 0)))

    # pack the batch as (slab, 8, L) so the kernel indexes whole (8,128)-tiles
    ids3 = ids32.reshape(Bp // SUB, SUB, L)
    sc3 = sc.reshape(Bp // SUB, SUB, L)

    seq_spec = pl.BlockSpec((ns, SUB, L), lambda b: (b, 0, 0))
    mlm_spec = pl.BlockSpec((ns, SUB, OUT_PAD), lambda b: (b, 0, 0))

    out_ids3, packed3 = pl.pallas_call(
        _mlm_kernel,
        grid=(Bp // step_rows,),
        in_specs=[seq_spec, seq_spec],
        out_specs=(seq_spec, mlm_spec),
        out_shape=(
            jax.ShapeDtypeStruct((Bp // SUB, SUB, L), jnp.int32),
            jax.ShapeDtypeStruct((Bp // SUB, SUB, OUT_PAD), jnp.int32),
        ),
        compiler_params=pltpu.CompilerParams(
            dimension_semantics=("parallel",)),
    )(ids3, sc3)

    out_ids = out_ids3.reshape(Bp, L)[:B]
    packed = packed3.reshape(Bp, OUT_PAD)[:B, :MAX_PRED]
    mlm_pos = packed >> 16
    mlm_tok = packed & 0xFFFF

    # attention mask is a pure passthrough -> return input directly
    return out_ids, attention_mask, mlm_tok, mlm_pos


if __name__ == "__main__":
    B, L = 16, 128   # small stand-in for RoBERTa's 512 max_length

    key = jax.random.PRNGKey(0)
    k1, k2, k3 = jax.random.split(key, 3)

    # Synthetic "encode_plus" output: <s> tok_1..tok_n </s> <pad>...
    n_tok = jax.random.randint(k1, (B,), 10, 60)                 # real tokens per turn
    body = jax.random.randint(k2, (B, L), 4, 50000)              # avoid special/mask ids
    posn = jnp.arange(L)[None, :]
    ids = jnp.full((B, L), PAD_ID, jnp.int32)
    ids = jnp.where(posn == n_tok[:, None] + 1, EOS_ID, ids)
    ids = jnp.where((posn >= 1) & (posn <= n_tok[:, None]), body, ids)
    ids = jnp.where(posn == 0, BOS_ID, ids).astype(jnp.int32)
    am = (posn <= n_tok[:, None] + 1).astype(jnp.int32)
    # random shuffle keys (replaces random.shuffle of candidate positions)
    scores = jax.random.uniform(k3, (B, L), jnp.float32)

    out = jax.block_until_ready(features_mlm_forward(ids, am, scores))
    out_ids, out_am, mlm_tok, mlm_pos = (np.asarray(o) for o in out)
    ids_np, am_np, ntk_np = np.asarray(ids), np.asarray(am), np.asarray(n_tok)

    # light semantic checks against the PyTorch reference behaviour
    for b in range(B):
        n_pred = min(MAX_PRED, max(1, int(round(int(ntk_np[b]) * 0.5))))
        assert int((out_ids[b] == MASK_ID).sum()) == n_pred
        assert np.array_equal(out_am[b], am_np[b])
        seen = set()
        for k_ in range(n_pred):
            p = int(mlm_pos[b, k_])
            assert p != 0 and p not in seen
            seen.add(p)
            assert int(mlm_tok[b, k_]) == int(ids_np[b, p])
            assert int(out_ids[b, p]) == MASK_ID
        assert np.all(mlm_pos[b, n_pred:] == 0)
        assert np.all(mlm_tok[b, n_pred:] == 0)
        unchanged = out_ids[b] != MASK_ID
        assert np.array_equal(out_ids[b][unchanged], ids_np[b][unchanged])

    print("KERNEL_OK")
</pallas_src>

<mosaic_0001>
module attributes {stable_mosaic.version = 11 : i64} {
  func.func @_mlm_kernel(%arg0: i32, %arg1: memref<1x8x128xi32, #tpu.memory_space<vmem>>, %arg2: memref<1x8x128xf32, #tpu.memory_space<vmem>>, %arg3: memref<1x8x128xi32, #tpu.memory_space<vmem>>, %arg4: memref<1x8x128xi32, #tpu.memory_space<vmem>>) attributes {dimension_semantics = [#tpu.dimension_semantics<parallel>], iteration_bounds = array<i64: 2>, scalar_prefetch = 0 : i64, scratch_operands = 0 : i64, tpu.core_type = #tpu.core_type<tc>, window_params = [{transform_indices = @transform_0, window_bounds = array<i64: 1, 8, 128>}, {transform_indices = @transform_1, window_bounds = array<i64: 1, 8, 128>}, {transform_indices = @transform_2, window_bounds = array<i64: 1, 8, 128>}, {transform_indices = @transform_3, window_bounds = array<i64: 1, 8, 128>}]} {
    %0 = tpu.iota {dimensions = array<i32: 1>} : vector<8x128xi32>
    %1 = tpu.iota {dimensions = array<i32: 1>} : vector<8x128xi32>
    %c0_i32 = arith.constant 0 : i32
    %2 = arith.index_cast %c0_i32 : i32 to index
    %c0 = arith.constant 0 : index
    %c0_0 = arith.constant 0 : index
    %3 = vector.load %arg1[%2, %c0, %c0_0] : memref<1x8x128xi32, #tpu.memory_space<vmem>>, vector<1x8x128xi32>
    %4 = vector.shape_cast %3 : vector<1x8x128xi32> to vector<8x128xi32>
    %5 = arith.index_cast %c0_i32 : i32 to index
    %c0_1 = arith.constant 0 : index
    %c0_2 = arith.constant 0 : index
    %6 = vector.load %arg2[%5, %c0_1, %c0_2] : memref<1x8x128xf32, #tpu.memory_space<vmem>>, vector<1x8x128xf32>
    %7 = vector.shape_cast %6 : vector<1x8x128xf32> to vector<8x128xf32>
    %c0_i32_3 = arith.constant 0 : i32
    %8 = vector.broadcast %c0_i32_3 : i32 to vector<8x128xi32>
    %9 = arith.cmpi ne, %4, %8 : vector<8x128xi32>
    %c1_i32 = arith.constant 1 : i32
    %10 = vector.broadcast %c1_i32 : i32 to vector<8x128xi32>
    %11 = arith.cmpi ne, %4, %10 : vector<8x128xi32>
    %12 = arith.andi %9, %11 : vector<8x128xi1>
    %c2_i32 = arith.constant 2 : i32
    %13 = vector.broadcast %c2_i32 : i32 to vector<8x128xi32>
    %14 = arith.cmpi ne, %4, %13 : vector<8x128xi32>
    %15 = arith.andi %12, %14 : vector<8x128xi1>
    %16 = arith.extui %15 : vector<8x128xi1> to vector<8x128xi32>
    %cst = arith.constant dense<0> : vector<8xi32>
    %17 = vector.multi_reduction <add>, %16, %cst [1] : vector<8x128xi32> to vector<8xi32>
    %18 = vector.shape_cast %17 : vector<8xi32> to vector<8x1xi32>
    %c1_i32_4 = arith.constant 1 : i32
    %19 = vector.broadcast %c1_i32_4 : i32 to vector<8x1xi32>
    %20 = arith.shrsi %18, %19 : vector<8x1xi32>
    %c1_i32_5 = arith.constant 1 : i32
    %21 = vector.broadcast %c1_i32_5 : i32 to vector<8x1xi32>
    %22 = arith.andi %18, %21 : vector<8x1xi32>
    %c1_i32_6 = arith.constant 1 : i32
    %23 = vector.broadcast %c1_i32_6 : i32 to vector<8x1xi32>
    %24 = arith.andi %20, %23 : vector<8x1xi32>
    %25 = arith.andi %22, %24 : vector<8x1xi32>
    %26 = arith.addi %20, %25 : vector<8x1xi32>
    %c1_i32_7 = arith.constant 1 : i32
    %c20_i32 = arith.constant 20 : i32
    %27 = vector.broadcast %c1_i32_7 : i32 to vector<8x1xi32>
    %28 = arith.maxsi %27, %26 : vector<8x1xi32>
    %29 = vector.broadcast %c20_i32 : i32 to vector<8x1xi32>
    %30 = arith.minsi %29, %28 : vector<8x1xi32>
    %31 = tpu.bitcast %7 : vector<8x128xf32> -> vector<8x128xi32>
    %c2147483520_i32 = arith.constant 2147483520 : i32
    %32 = vector.broadcast %c2147483520_i32 : i32 to vector<8x128xi32>
    %33 = arith.andi %31, %32 : vector<8x128xi32>
    %34 = arith.ori %33, %0 : vector<8x128xi32>
    %c2147483647_i32 = arith.constant 2147483647 : i32
    %35 = vector.broadcast %c2147483647_i32 : i32 to vector<8x128xi32>
    %36 = arith.select %15, %34, %35 : vector<8x128xi1>, vector<8x128xi32>
    %false = arith.constant false
    %37 = vector.broadcast %false : i1 to vector<8x128xi1>
    %c0_i32_8 = arith.constant 0 : i32
    %38 = vector.broadcast %c0_i32_8 : i32 to vector<8x128xi32>
    %c0_i32_9 = arith.constant 0 : i32
    %39 = vector.broadcast %c0_i32_9 : i32 to vector<8x128xi32>
    %c0_i32_10 = arith.constant 0 : i32
    %cst_11 = arith.constant dense<2147483647> : vector<8xi32>
    %40 = vector.multi_reduction <minsi>, %36, %cst_11 [1] : vector<8x128xi32> to vector<8xi32>
    %41 = vector.shape_cast %40 : vector<8xi32> to vector<8x1xi32>
    %c127_i32 = arith.constant 127 : i32
    %42 = vector.broadcast %c127_i32 : i32 to vector<8x1xi32>
    %43 = arith.andi %41, %42 : vector<8x1xi32>
    %44 = vector.broadcast %43 : vector<8x1xi32> to vector<8x128xi32>
    %45 = arith.cmpi eq, %0, %44 : vector<8x128xi32>
    %c0_i32_12 = arith.constant 0 : i32
    %46 = vector.broadcast %c0_i32_12 : i32 to vector<8x128xi32>
    %47 = arith.select %45, %4, %46 : vector<8x128xi1>, vector<8x128xi32>
    %cst_13 = arith.constant dense<0> : vector<8xi32>
    %48 = vector.multi_reduction <add>, %47, %cst_13 [1] : vector<8x128xi32> to vector<8xi32>
    %49 = vector.shape_cast %48 : vector<8xi32> to vector<8x1xi32>
    %50 = vector.broadcast %c0_i32_10 : i32 to vector<8x1xi32>
    %51 = arith.cmpi slt, %50, %30 : vector<8x1xi32>
    %c2147483647_i32_14 = arith.constant 2147483647 : i32
    %52 = vector.broadcast %c2147483647_i32_14 : i32 to vector<8x1xi32>
    %53 = arith.cmpi slt, %41, %52 : vector<8x1xi32>
    %54 = arith.andi %51, %53 : vector<8x1xi1>
    %55 = vector.broadcast %54 : vector<8x1xi1> to vector<8x128xi1>
    %56 = arith.andi %45, %55 : vector<8x128xi1>
    %57 = arith.ori %37, %56 : vector<8x128xi1>
    %58 = vector.broadcast %c0_i32_10 : i32 to vector<8x128xi32>
    %59 = arith.cmpi eq, %1, %58 : vector<8x128xi32>
    %60 = vector.broadcast %54 : vector<8x1xi1> to vector<8x128xi1>
    %61 = arith.andi %59, %60 : vector<8x128xi1>
    %62 = vector.shape_cast %43 : vector<8x1xi32> to vector<8x1xi32>
    %63 = vector.broadcast %62 : vector<8x1xi32> to vector<8x128xi32>
    %64 = arith.select %61, %63, %38 : vector<8x128xi1>, vector<8x128xi32>
    %65 = vector.shape_cast %49 : vector<8x1xi32> to vector<8x1xi32>
    %66 = vector.broadcast %65 : vector<8x1xi32> to vector<8x128xi32>
    %67 = arith.select %61, %66, %39 : vector<8x128xi1>, vector<8x128xi32>
    %c2147483647_i32_15 = arith.constant 2147483647 : i32
    %68 = vector.broadcast %c2147483647_i32_15 : i32 to vector<8x128xi32>
    %69 = arith.select %45, %68, %36 : vector<8x128xi1>, vector<8x128xi32>
    %c1_i32_16 = arith.constant 1 : i32
    %cst_17 = arith.constant dense<2147483647> : vector<8xi32>
    %70 = vector.multi_reduction <minsi>, %69, %cst_17 [1] : vector<8x128xi32> to vector<8xi32>
    %71 = vector.shape_cast %70 : vector<8xi32> to vector<8x1xi32>
    %c127_i32_18 = arith.constant 127 : i32
    %72 = vector.broadcast %c127_i32_18 : i32 to vector<8x1xi32>
    %73 = arith.andi %71, %72 : vector<8x1xi32>
    %74 = vector.broadcast %73 : vector<8x1xi32> to vector<8x128xi32>
    %75 = arith.cmpi eq, %0, %74 : vector<8x128xi32>
    %c0_i32_19 = arith.constant 0 : i32
    %76 = vector.broadcast %c0_i32_19 : i32 to vector<8x128xi32>
    %77 = arith.select %75, %4, %76 : vector<8x128xi1>, vector<8x128xi32>
    %cst_20 = arith.constant dense<0> : vector<8xi32>
    %78 = vector.multi_reduction <add>, %77, %cst_20 [1] : vector<8x128xi32> to vector<8xi32>
    %79 = vector.shape_cast %78 : vector<8xi32> to vector<8x1xi32>
    %80 = vector.broadcast %c1_i32_16 : i32 to vector<8x1xi32>
    %81 = arith.cmpi slt, %80, %30 : vector<8x1xi32>
    %c2147483647_i32_21 = arith.constant 2147483647 : i32
    %82 = vector.broadcast %c2147483647_i32_21 : i32 to vector<8x1xi32>
    %83 = arith.cmpi slt, %71, %82 : vector<8x1xi32>
    %84 = arith.andi %81, %83 : vector<8x1xi1>
    %85 = vector.broadcast %84 : vector<8x1xi1> to vector<8x128xi1>
    %86 = arith.andi %75, %85 : vector<8x128xi1>
    %87 = arith.ori %57, %86 : vector<8x128xi1>
    %88 = vector.broadcast %c1_i32_16 : i32 to vector<8x128xi32>
    %89 = arith.cmpi eq, %1, %88 : vector<8x128xi32>
    %90 = vector.broadcast %84 : vector<8x1xi1> to vector<8x128xi1>
    %91 = arith.andi %89, %90 : vector<8x128xi1>
    %92 = vector.shape_cast %73 : vector<8x1xi32> to vector<8x1xi32>
    %93 = vector.broadcast %92 : vector<8x1xi32> to vector<8x128xi32>
    %94 = arith.select %91, %93, %64 : vector<8x128xi1>, vector<8x128xi32>
    %95 = vector.shape_cast %79 : vector<8x1xi32> to vector<8x1xi32>
    %96 = vector.broadcast %95 : vector<8x1xi32> to vector<8x128xi32>
    %97 = arith.select %91, %96, %67 : vector<8x128xi1>, vector<8x128xi32>
    %c2147483647_i32_22 = arith.constant 2147483647 : i32
    %98 = vector.broadcast %c2147483647_i32_22 : i32 to vector<8x128xi32>
    %99 = arith.select %75, %98, %69 : vector<8x128xi1>, vector<8x128xi32>
    %c2_i32_23 = arith.constant 2 : i32
    %cst_24 = arith.constant dense<2147483647> : vector<8xi32>
    %100 = vector.multi_reduction <minsi>, %99, %cst_24 [1] : vector<8x128xi32> to vector<8xi32>
    %101 = vector.shape_cast %100 : vector<8xi32> to vector<8x1xi32>
    %c127_i32_25 = arith.constant 127 : i32
    %102 = vector.broadcast %c127_i32_25 : i32 to vector<8x1xi32>
    %103 = arith.andi %101, %102 : vector<8x1xi32>
    %104 = vector.broadcast %103 : vector<8x1xi32> to vector<8x128xi32>
    %105 = arith.cmpi eq, %0, %104 : vector<8x128xi32>
    %c0_i32_26 = arith.constant 0 : i32
    %106 = vector.broadcast %c0_i32_26 : i32 to vector<8x128xi32>
    %107 = arith.select %105, %4, %106 : vector<8x128xi1>, vector<8x128xi32>
    %cst_27 = arith.constant dense<0> : vector<8xi32>
    %108 = vector.multi_reduction <add>, %107, %cst_27 [1] : vector<8x128xi32> to vector<8xi32>
    %109 = vector.shape_cast %108 : vector<8xi32> to vector<8x1xi32>
    %110 = vector.broadcast %c2_i32_23 : i32 to vector<8x1xi32>
    %111 = arith.cmpi slt, %110, %30 : vector<8x1xi32>
    %c2147483647_i32_28 = arith.constant 2147483647 : i32
    %112 = vector.broadcast %c2147483647_i32_28 : i32 to vector<8x1xi32>
    %113 = arith.cmpi slt, %101, %112 : vector<8x1xi32>
    %114 = arith.andi %111, %113 : vector<8x1xi1>
    %115 = vector.broadcast %114 : vector<8x1xi1> to vector<8x128xi1>
    %116 = arith.andi %105, %115 : vector<8x128xi1>
    %117 = arith.ori %87, %116 : vector<8x128xi1>
    %118 = vector.broadcast %c2_i32_23 : i32 to vector<8x128xi32>
    %119 = arith.cmpi eq, %1, %118 : vector<8x128xi32>
    %120 = vector.broadcast %114 : vector<8x1xi1> to vector<8x128xi1>
    %121 = arith.andi %119, %120 : vector<8x128xi1>
    %122 = vector.shape_cast %103 : vector<8x1xi32> to vector<8x1xi32>
    %123 = vector.broadcast %122 : vector<8x1xi32> to vector<8x128xi32>
    %124 = arith.select %121, %123, %94 : vector<8x128xi1>, vector<8x128xi32>
    %125 = vector.shape_cast %109 : vector<8x1xi32> to vector<8x1xi32>
    %126 = vector.broadcast %125 : vector<8x1xi32> to vector<8x128xi32>
    %127 = arith.select %121, %126, %97 : vector<8x128xi1>, vector<8x128xi32>
    %c2147483647_i32_29 = arith.constant 2147483647 : i32
    %128 = vector.broadcast %c2147483647_i32_29 : i32 to vector<8x128xi32>
    %129 = arith.select %105, %128, %99 : vector<8x128xi1>, vector<8x128xi32>
    %c3_i32 = arith.constant 3 : i32
    %cst_30 = arith.constant dense<2147483647> : vector<8xi32>
    %130 = vector.multi_reduction <minsi>, %129, %cst_30 [1] : vector<8x128xi32> to vector<8xi32>
    %131 = vector.shape_cast %130 : vector<8xi32> to vector<8x1xi32>
    %c127_i32_31 = arith.constant 127 : i32
    %132 = vector.broadcast %c127_i32_31 : i32 to vector<8x1xi32>
    %133 = arith.andi %131, %132 : vector<8x1xi32>
    %134 = vector.broadcast %133 : vector<8x1xi32> to vector<8x128xi32>
    %135 = arith.cmpi eq, %0, %134 : vector<8x128xi32>
    %c0_i32_32 = arith.constant 0 : i32
    %136 = vector.broadcast %c0_i32_32 : i32 to vector<8x128xi32>
    %137 = arith.select %135, %4, %136 : vector<8x128xi1>, vector<8x128xi32>
    %cst_33 = arith.constant dense<0> : vector<8xi32>
    %138 = vector.multi_reduction <add>, %137, %cst_33 [1] : vector<8x128xi32> to vector<8xi32>
    %139 = vector.shape_cast %138 : vector<8xi32> to vector<8x1xi32>
    %140 = vector.broadcast %c3_i32 : i32 to vector<8x1xi32>
    %141 = arith.cmpi slt, %140, %30 : vector<8x1xi32>
    %c2147483647_i32_34 = arith.constant 2147483647 : i32
    %142 = vector.broadcast %c2147483647_i32_34 : i32 to vector<8x1xi32>
    %143 = arith.cmpi slt, %131, %142 : vector<8x1xi32>
    %144 = arith.andi %141, %143 : vector<8x1xi1>
    %145 = vector.broadcast %144 : vector<8x1xi1> to vector<8x128xi1>
    %146 = arith.andi %135, %145 : vector<8x128xi1>
    %147 = arith.ori %117, %146 : vector<8x128xi1>
    %148 = vector.broadcast %c3_i32 : i32 to vector<8x128xi32>
    %149 = arith.cmpi eq, %1, %148 : vector<8x128xi32>
    %150 = vector.broadcast %144 : vector<8x1xi1> to vector<8x128xi1>
    %151 = arith.andi %149, %150 : vector<8x128xi1>
    %152 = vector.shape_cast %133 : vector<8x1xi32> to vector<8x1xi32>
    %153 = vector.broadcast %152 : vector<8x1xi32> to vector<8x128xi32>
    %154 = arith.select %151, %153, %124 : vector<8x128xi1>, vector<8x128xi32>
    %155 = vector.shape_cast %139 : vector<8x1xi32> to vector<8x1xi32>
    %156 = vector.broadcast %155 : vector<8x1xi32> to vector<8x128xi32>
    %157 = arith.select %151, %156, %127 : vector<8x128xi1>, vector<8x128xi32>
    %c2147483647_i32_35 = arith.constant 2147483647 : i32
    %158 = vector.broadcast %c2147483647_i32_35 : i32 to vector<8x128xi32>
    %159 = arith.select %135, %158, %129 : vector<8x128xi1>, vector<8x128xi32>
    %c4_i32 = arith.constant 4 : i32
    %cst_36 = arith.constant dense<2147483647> : vector<8xi32>
    %160 = vector.multi_reduction <minsi>, %159, %cst_36 [1] : vector<8x128xi32> to vector<8xi32>
    %161 = vector.shape_cast %160 : vector<8xi32> to vector<8x1xi32>
    %c127_i32_37 = arith.constant 127 : i32
    %162 = vector.broadcast %c127_i32_37 : i32 to vector<8x1xi32>
    %163 = arith.andi %161, %162 : vector<8x1xi32>
    %164 = vector.broadcast %163 : vector<8x1xi32> to vector<8x128xi32>
    %165 = arith.cmpi eq, %0, %164 : vector<8x128xi32>
    %c0_i32_38 = arith.constant 0 : i32
    %166 = vector.broadcast %c0_i32_38 : i32 to vector<8x128xi32>
    %167 = arith.select %165, %4, %166 : vector<8x128xi1>, vector<8x128xi32>
    %cst_39 = arith.constant dense<0> : vector<8xi32>
    %168 = vector.multi_reduction <add>, %167, %cst_39 [1] : vector<8x128xi32> to vector<8xi32>
    %169 = vector.shape_cast %168 : vector<8xi32> to vector<8x1xi32>
    %170 = vector.broadcast %c4_i32 : i32 to vector<8x1xi32>
    %171 = arith.cmpi slt, %170, %30 : vector<8x1xi32>
    %c2147483647_i32_40 = arith.constant 2147483647 : i32
    %172 = vector.broadcast %c2147483647_i32_40 : i32 to vector<8x1xi32>
    %173 = arith.cmpi slt, %161, %172 : vector<8x1xi32>
    %174 = arith.andi %171, %173 : vector<8x1xi1>
    %175 = vector.broadcast %174 : vector<8x1xi1> to vector<8x128xi1>
    %176 = arith.andi %165, %175 : vector<8x128xi1>
    %177 = arith.ori %147, %176 : vector<8x128xi1>
    %178 = vector.broadcast %c4_i32 : i32 to vector<8x128xi32>
    %179 = arith.cmpi eq, %1, %178 : vector<8x128xi32>
    %180 = vector.broadcast %174 : vector<8x1xi1> to vector<8x128xi1>
    %181 = arith.andi %179, %180 : vector<8x128xi1>
    %182 = vector.shape_cast %163 : vector<8x1xi32> to vector<8x1xi32>
    %183 = vector.broadcast %182 : vector<8x1xi32> to vector<8x128xi32>
    %184 = arith.select %181, %183, %154 : vector<8x128xi1>, vector<8x128xi32>
    %185 = vector.shape_cast %169 : vector<8x1xi32> to vector<8x1xi32>
    %186 = vector.broadcast %185 : vector<8x1xi32> to vector<8x128xi32>
    %187 = arith.select %181, %186, %157 : vector<8x128xi1>, vector<8x128xi32>
    %c2147483647_i32_41 = arith.constant 2147483647 : i32
    %188 = vector.broadcast %c2147483647_i32_41 : i32 to vector<8x128xi32>
    %189 = arith.select %165, %188, %159 : vector<8x128xi1>, vector<8x128xi32>
    %c5_i32 = arith.constant 5 : i32
    %cst_42 = arith.constant dense<2147483647> : vector<8xi32>
    %190 = vector.multi_reduction <minsi>, %189, %cst_42 [1] : vector<8x128xi32> to vector<8xi32>
    %191 = vector.shape_cast %190 : vector<8xi32> to vector<8x1xi32>
    %c127_i32_43 = arith.constant 127 : i32
    %192 = vector.broadcast %c127_i32_43 : i32 to vector<8x1xi32>
    %193 = arith.andi %191, %192 : vector<8x1xi32>
    %194 = vector.broadcast %193 : vector<8x1xi32> to vector<8x128xi32>
    %195 = arith.cmpi eq, %0, %194 : vector<8x128xi32>
    %c0_i32_44 = arith.constant 0 : i32
    %196 = vector.broadcast %c0_i32_44 : i32 to vector<8x128xi32>
    %197 = arith.select %195, %4, %196 : vector<8x128xi1>, vector<8x128xi32>
    %cst_45 = arith.constant dense<0> : vector<8xi32>
    %198 = vector.multi_reduction <add>, %197, %cst_45 [1] : vector<8x128xi32> to vector<8xi32>
    %199 = vector.shape_cast %198 : vector<8xi32> to vector<8x1xi32>
    %200 = vector.broadcast %c5_i32 : i32 to vector<8x1xi32>
    %201 = arith.cmpi slt, %200, %30 : vector<8x1xi32>
    %c2147483647_i32_46 = arith.constant 2147483647 : i32
    %202 = vector.broadcast %c2147483647_i32_46 : i32 to vector<8x1xi32>
    %203 = arith.cmpi slt, %191, %202 : vector<8x1xi32>
    %204 = arith.andi %201, %203 : vector<8x1xi1>
    %205 = vector.broadcast %204 : vector<8x1xi1> to vector<8x128xi1>
    %206 = arith.andi %195, %205 : vector<8x128xi1>
    %207 = arith.ori %177, %206 : vector<8x128xi1>
    %208 = vector.broadcast %c5_i32 : i32 to vector<8x128xi32>
    %209 = arith.cmpi eq, %1, %208 : vector<8x128xi32>
    %210 = vector.broadcast %204 : vector<8x1xi1> to vector<8x128xi1>
    %211 = arith.andi %209, %210 : vector<8x128xi1>
    %212 = vector.shape_cast %193 : vector<8x1xi32> to vector<8x1xi32>
    %213 = vector.broadcast %212 : vector<8x1xi32> to vector<8x128xi32>
    %214 = arith.select %211, %213, %184 : vector<8x128xi1>, vector<8x128xi32>
    %215 = vector.shape_cast %199 : vector<8x1xi32> to vector<8x1xi32>
    %216 = vector.broadcast %215 : vector<8x1xi32> to vector<8x128xi32>
    %217 = arith.select %211, %216, %187 : vector<8x128xi1>, vector<8x128xi32>
    %c2147483647_i32_47 = arith.constant 2147483647 : i32
    %218 = vector.broadcast %c2147483647_i32_47 : i32 to vector<8x128xi32>
    %219 = arith.select %195, %218, %189 : vector<8x128xi1>, vector<8x128xi32>
    %c6_i32 = arith.constant 6 : i32
    %cst_48 = arith.constant dense<2147483647> : vector<8xi32>
    %220 = vector.multi_reduction <minsi>, %219, %cst_48 [1] : vector<8x128xi32> to vector<8xi32>
    %221 = vector.shape_cast %220 : vector<8xi32> to vector<8x1xi32>
    %c127_i32_49 = arith.constant 127 : i32
    %222 = vector.broadcast %c127_i32_49 : i32 to vector<8x1xi32>
    %223 = arith.andi %221, %222 : vector<8x1xi32>
    %224 = vector.broadcast %223 : vector<8x1xi32> to vector<8x128xi32>
    %225 = arith.cmpi eq, %0, %224 : vector<8x128xi32>
    %c0_i32_50 = arith.constant 0 : i32
    %226 = vector.broadcast %c0_i32_50 : i32 to vector<8x128xi32>
    %227 = arith.select %225, %4, %226 : vector<8x128xi1>, vector<8x128xi32>
    %cst_51 = arith.constant dense<0> : vector<8xi32>
    %228 = vector.multi_reduction <add>, %227, %cst_51 [1] : vector<8x128xi32> to vector<8xi32>
    %229 = vector.shape_cast %228 : vector<8xi32> to vector<8x1xi32>
    %230 = vector.broadcast %c6_i32 : i32 to vector<8x1xi32>
    %231 = arith.cmpi slt, %230, %30 : vector<8x1xi32>
    %c2147483647_i32_52 = arith.constant 2147483647 : i32
    %232 = vector.broadcast %c2147483647_i32_52 : i32 to vector<8x1xi32>
    %233 = arith.cmpi slt, %221, %232 : vector<8x1xi32>
    %234 = arith.andi %231, %233 : vector<8x1xi1>
    %235 = vector.broadcast %234 : vector<8x1xi1> to vector<8x128xi1>
    %236 = arith.andi %225, %235 : vector<8x128xi1>
    %237 = arith.ori %207, %236 : vector<8x128xi1>
    %238 = vector.broadcast %c6_i32 : i32 to vector<8x128xi32>
    %239 = arith.cmpi eq, %1, %238 : vector<8x128xi32>
    %240 = vector.broadcast %234 : vector<8x1xi1> to vector<8x128xi1>
    %241 = arith.andi %239, %240 : vector<8x128xi1>
    %242 = vector.shape_cast %223 : vector<8x1xi32> to vector<8x1xi32>
    %243 = vector.broadcast %242 : vector<8x1xi32> to vector<8x128xi32>
    %244 = arith.select %241, %243, %214 : vector<8x128xi1>, vector<8x128xi32>
    %245 = vector.shape_cast %229 : vector<8x1xi32> to vector<8x1xi32>
    %246 = vector.broadcast %245 : vector<8x1xi32> to vector<8x128xi32>
    %247 = arith.select %241, %246, %217 : vector<8x128xi1>, vector<8x128xi32>
    %c2147483647_i32_53 = arith.constant 2147483647 : i32
    %248 = vector.broadcast %c2147483647_i32_53 : i32 to vector<8x128xi32>
    %249 = arith.select %225, %248, %219 : vector<8x128xi1>, vector<8x128xi32>
    %c7_i32 = arith.constant 7 : i32
    %cst_54 = arith.constant dense<2147483647> : vector<8xi32>
    %250 = vector.multi_reduction <minsi>, %249, %cst_54 [1] : vector<8x128xi32> to vector<8xi32>
    %251 = vector.shape_cast %250 : vector<8xi32> to vector<8x1xi32>
    %c127_i32_55 = arith.constant 127 : i32
    %252 = vector.broadcast %c127_i32_55 : i32 to vector<8x1xi32>
    %253 = arith.andi %251, %252 : vector<8x1xi32>
    %254 = vector.broadcast %253 : vector<8x1xi32> to vector<8x128xi32>
    %255 = arith.cmpi eq, %0, %254 : vector<8x128xi32>
    %c0_i32_56 = arith.constant 0 : i32
    %256 = vector.broadcast %c0_i32_56 : i32 to vector<8x128xi32>
    %257 = arith.select %255, %4, %256 : vector<8x128xi1>, vector<8x128xi32>
    %cst_57 = arith.constant dense<0> : vector<8xi32>
    %258 = vector.multi_reduction <add>, %257, %cst_57 [1] : vector<8x128xi32> to vector<8xi32>
    %259 = vector.shape_cast %258 : vector<8xi32> to vector<8x1xi32>
    %260 = vector.broadcast %c7_i32 : i32 to vector<8x1xi32>
    %261 = arith.cmpi slt, %260, %30 : vector<8x1xi32>
    %c2147483647_i32_58 = arith.constant 2147483647 : i32
    %262 = vector.broadcast %c2147483647_i32_58 : i32 to vector<8x1xi32>
    %263 = arith.cmpi slt, %251, %262 : vector<8x1xi32>
    %264 = arith.andi %261, %263 : vector<8x1xi1>
    %265 = vector.broadcast %264 : vector<8x1xi1> to vector<8x128xi1>
    %266 = arith.andi %255, %265 : vector<8x128xi1>
    %267 = arith.ori %237, %266 : vector<8x128xi1>
    %268 = vector.broadcast %c7_i32 : i32 to vector<8x128xi32>
    %269 = arith.cmpi eq, %1, %268 : vector<8x128xi32>
    %270 = vector.broadcast %264 : vector<8x1xi1> to vector<8x128xi1>
    %271 = arith.andi %269, %270 : vector<8x128xi1>
    %272 = vector.shape_cast %253 : vector<8x1xi32> to vector<8x1xi32>
    %273 = vector.broadcast %272 : vector<8x1xi32> to vector<8x128xi32>
    %274 = arith.select %271, %273, %244 : vector<8x128xi1>, vector<8x128xi32>
    %275 = vector.shape_cast %259 : vector<8x1xi32> to vector<8x1xi32>
    %276 = vector.broadcast %275 : vector<8x1xi32> to vector<8x128xi32>
    %277 = arith.select %271, %276, %247 : vector<8x128xi1>, vector<8x128xi32>
    %c2147483647_i32_59 = arith.constant 2147483647 : i32
    %278 = vector.broadcast %c2147483647_i32_59 : i32 to vector<8x128xi32>
    %279 = arith.select %255, %278, %249 : vector<8x128xi1>, vector<8x128xi32>
    %c8_i32 = arith.constant 8 : i32
    %cst_60 = arith.constant dense<2147483647> : vector<8xi32>
    %280 = vector.multi_reduction <minsi>, %279, %cst_60 [1] : vector<8x128xi32> to vector<8xi32>
    %281 = vector.shape_cast %280 : vector<8xi32> to vector<8x1xi32>
    %c127_i32_61 = arith.constant 127 : i32
    %282 = vector.broadcast %c127_i32_61 : i32 to vector<8x1xi32>
    %283 = arith.andi %281, %282 : vector<8x1xi32>
    %284 = vector.broadcast %283 : vector<8x1xi32> to vector<8x128xi32>
    %285 = arith.cmpi eq, %0, %284 : vector<8x128xi32>
    %c0_i32_62 = arith.constant 0 : i32
    %286 = vector.broadcast %c0_i32_62 : i32 to vector<8x128xi32>
    %287 = arith.select %285, %4, %286 : vector<8x128xi1>, vector<8x128xi32>
    %cst_63 = arith.constant dense<0> : vector<8xi32>
    %288 = vector.multi_reduction <add>, %287, %cst_63 [1] : vector<8x128xi32> to vector<8xi32>
    %289 = vector.shape_cast %288 : vector<8xi32> to vector<8x1xi32>
    %290 = vector.broadcast %c8_i32 : i32 to vector<8x1xi32>
    %291 = arith.cmpi slt, %290, %30 : vector<8x1xi32>
    %c2147483647_i32_64 = arith.constant 2147483647 : i32
    %292 = vector.broadcast %c2147483647_i32_64 : i32 to vector<8x1xi32>
    %293 = arith.cmpi slt, %281, %292 : vector<8x1xi32>
    %294 = arith.andi %291, %293 : vector<8x1xi1>
    %295 = vector.broadcast %294 : vector<8x1xi1> to vector<8x128xi1>
    %296 = arith.andi %285, %295 : vector<8x128xi1>
    %297 = arith.ori %267, %296 : vector<8x128xi1>
    %298 = vector.broadcast %c8_i32 : i32 to vector<8x128xi32>
    %299 = arith.cmpi eq, %1, %298 : vector<8x128xi32>
    %300 = vector.broadcast %294 : vector<8x1xi1> to vector<8x128xi1>
    %301 = arith.andi %299, %300 : vector<8x128xi1>
    %302 = vector.shape_cast %283 : vector<8x1xi32> to vector<8x1xi32>
    %303 = vector.broadcast %302 : vector<8x1xi32> to vector<8x128xi32>
    %304 = arith.select %301, %303, %274 : vector<8x128xi1>, vector<8x128xi32>
    %305 = vector.shape_cast %289 : vector<8x1xi32> to vector<8x1xi32>
    %306 = vector.broadcast %305 : vector<8x1xi32> to vector<8x128xi32>
    %307 = arith.select %301, %306, %277 : vector<8x128xi1>, vector<8x128xi32>
    %c2147483647_i32_65 = arith.constant 2147483647 : i32
    %308 = vector.broadcast %c2147483647_i32_65 : i32 to vector<8x128xi32>
    %309 = arith.select %285, %308, %279 : vector<8x128xi1>, vector<8x128xi32>
    %c9_i32 = arith.constant 9 : i32
    %cst_66 = arith.constant dense<2147483647> : vector<8xi32>
    %310 = vector.multi_reduction <minsi>, %309, %cst_66 [1] : vector<8x128xi32> to vector<8xi32>
    %311 = vector.shape_cast %310 : vector<8xi32> to vector<8x1xi32>
    %c127_i32_67 = arith.constant 127 : i32
    %312 = vector.broadcast %c127_i32_67 : i32 to vector<8x1xi32>
    %313 = arith.andi %311, %312 : vector<8x1xi32>
    %314 = vector.broadcast %313 : vector<8x1xi32> to vector<8x128xi32>
    %315 = arith.cmpi eq, %0, %314 : vector<8x128xi32>
    %c0_i32_68 = arith.constant 0 : i32
    %316 = vector.broadcast %c0_i32_68 : i32 to vector<8x128xi32>
    %317 = arith.select %315, %4, %316 : vector<8x128xi1>, vector<8x128xi32>
    %cst_69 = arith.constant dense<0> : vector<8xi32>
    %318 = vector.multi_reduction <add>, %317, %cst_69 [1] : vector<8x128xi32> to vector<8xi32>
    %319 = vector.shape_cast %318 : vector<8xi32> to vector<8x1xi32>
    %320 = vector.broadcast %c9_i32 : i32 to vector<8x1xi32>
    %321 = arith.cmpi slt, %320, %30 : vector<8x1xi32>
    %c2147483647_i32_70 = arith.constant 2147483647 : i32
    %322 = vector.broadcast %c2147483647_i32_70 : i32 to vector<8x1xi32>
    %323 = arith.cmpi slt, %311, %322 : vector<8x1xi32>
    %324 = arith.andi %321, %323 : vector<8x1xi1>
    %325 = vector.broadcast %324 : vector<8x1xi1> to vector<8x128xi1>
    %326 = arith.andi %315, %325 : vector<8x128xi1>
    %327 = arith.ori %297, %326 : vector<8x128xi1>
    %328 = vector.broadcast %c9_i32 : i32 to vector<8x128xi32>
    %329 = arith.cmpi eq, %1, %328 : vector<8x128xi32>
    %330 = vector.broadcast %324 : vector<8x1xi1> to vector<8x128xi1>
    %331 = arith.andi %329, %330 : vector<8x128xi1>
    %332 = vector.shape_cast %313 : vector<8x1xi32> to vector<8x1xi32>
    %333 = vector.broadcast %332 : vector<8x1xi32> to vector<8x128xi32>
    %334 = arith.select %331, %333, %304 : vector<8x128xi1>, vector<8x128xi32>
    %335 = vector.shape_cast %319 : vector<8x1xi32> to vector<8x1xi32>
    %336 = vector.broadcast %335 : vector<8x1xi32> to vector<8x128xi32>
    %337 = arith.select %331, %336, %307 : vector<8x128xi1>, vector<8x128xi32>
    %c2147483647_i32_71 = arith.constant 2147483647 : i32
    %338 = vector.broadcast %c2147483647_i32_71 : i32 to vector<8x128xi32>
    %339 = arith.select %315, %338, %309 : vector<8x128xi1>, vector<8x128xi32>
    %c10_i32 = arith.constant 10 : i32
    %cst_72 = arith.constant dense<2147483647> : vector<8xi32>
    %340 = vector.multi_reduction <minsi>, %339, %cst_72 [1] : vector<8x128xi32> to vector<8xi32>
    %341 = vector.shape_cast %340 : vector<8xi32> to vector<8x1xi32>
    %c127_i32_73 = arith.constant 127 : i32
    %342 = vector.broadcast %c127_i32_73 : i32 to vector<8x1xi32>
    %343 = arith.andi %341, %342 : vector<8x1xi32>
    %344 = vector.broadcast %343 : vector<8x1xi32> to vector<8x128xi32>
    %345 = arith.cmpi eq, %0, %344 : vector<8x128xi32>
    %c0_i32_74 = arith.constant 0 : i32
    %346 = vector.broadcast %c0_i32_74 : i32 to vector<8x128xi32>
    %347 = arith.select %345, %4, %346 : vector<8x128xi1>, vector<8x128xi32>
    %cst_75 = arith.constant dense<0> : vector<8xi32>
    %348 = vector.multi_reduction <add>, %347, %cst_75 [1] : vector<8x128xi32> to vector<8xi32>
    %349 = vector.shape_cast %348 : vector<8xi32> to vector<8x1xi32>
    %350 = vector.broadcast %c10_i32 : i32 to vector<8x1xi32>
    %351 = arith.cmpi slt, %350, %30 : vector<8x1xi32>
    %c2147483647_i32_76 = arith.constant 2147483647 : i32
    %352 = vector.broadcast %c2147483647_i32_76 : i32 to vector<8x1xi32>
    %353 = arith.cmpi slt, %341, %352 : vector<8x1xi32>
    %354 = arith.andi %351, %353 : vector<8x1xi1>
    %355 = vector.broadcast %354 : vector<8x1xi1> to vector<8x128xi1>
    %356 = arith.andi %345, %355 : vector<8x128xi1>
    %357 = arith.ori %327, %356 : vector<8x128xi1>
    %358 = vector.broadcast %c10_i32 : i32 to vector<8x128xi32>
    %359 = arith.cmpi eq, %1, %358 : vector<8x128xi32>
    %360 = vector.broadcast %354 : vector<8x1xi1> to vector<8x128xi1>
    %361 = arith.andi %359, %360 : vector<8x128xi1>
    %362 = vector.shape_cast %343 : vector<8x1xi32> to vector<8x1xi32>
    %363 = vector.broadcast %362 : vector<8x1xi32> to vector<8x128xi32>
    %364 = arith.select %361, %363, %334 : vector<8x128xi1>, vector<8x128xi32>
    %365 = vector.shape_cast %349 : vector<8x1xi32> to vector<8x1xi32>
    %366 = vector.broadcast %365 : vector<8x1xi32> to vector<8x128xi32>
    %367 = arith.select %361, %366, %337 : vector<8x128xi1>, vector<8x128xi32>
    %c2147483647_i32_77 = arith.constant 2147483647 : i32
    %368 = vector.broadcast %c2147483647_i32_77 : i32 to vector<8x128xi32>
    %369 = arith.select %345, %368, %339 : vector<8x128xi1>, vector<8x128xi32>
    %c11_i32 = arith.constant 11 : i32
    %cst_78 = arith.constant dense<2147483647> : vector<8xi32>
    %370 = vector.multi_reduction <minsi>, %369, %cst_78 [1] : vector<8x128xi32> to vector<8xi32>
    %371 = vector.shape_cast %370 : vector<8xi32> to vector<8x1xi32>
    %c127_i32_79 = arith.constant 127 : i32
    %372 = vector.broadcast %c127_i32_79 : i32 to vector<8x1xi32>
    %373 = arith.andi %371, %372 : vector<8x1xi32>
    %374 = vector.broadcast %373 : vector<8x1xi32> to vector<8x128xi32>
    %375 = arith.cmpi eq, %0, %374 : vector<8x128xi32>
    %c0_i32_80 = arith.constant 0 : i32
    %376 = vector.broadcast %c0_i32_80 : i32 to vector<8x128xi32>
    %377 = arith.select %375, %4, %376 : vector<8x128xi1>, vector<8x128xi32>
    %cst_81 = arith.constant dense<0> : vector<8xi32>
    %378 = vector.multi_reduction <add>, %377, %cst_81 [1] : vector<8x128xi32> to vector<8xi32>
    %379 = vector.shape_cast %378 : vector<8xi32> to vector<8x1xi32>
    %380 = vector.broadcast %c11_i32 : i32 to vector<8x1xi32>
    %381 = arith.cmpi slt, %380, %30 : vector<8x1xi32>
    %c2147483647_i32_82 = arith.constant 2147483647 : i32
    %382 = vector.broadcast %c2147483647_i32_82 : i32 to vector<8x1xi32>
    %383 = arith.cmpi slt, %371, %382 : vector<8x1xi32>
    %384 = arith.andi %381, %383 : vector<8x1xi1>
    %385 = vector.broadcast %384 : vector<8x1xi1> to vector<8x128xi1>
    %386 = arith.andi %375, %385 : vector<8x128xi1>
    %387 = arith.ori %357, %386 : vector<8x128xi1>
    %388 = vector.broadcast %c11_i32 : i32 to vector<8x128xi32>
    %389 = arith.cmpi eq, %1, %388 : vector<8x128xi32>
    %390 = vector.broadcast %384 : vector<8x1xi1> to vector<8x128xi1>
    %391 = arith.andi %389, %390 : vector<8x128xi1>
    %392 = vector.shape_cast %373 : vector<8x1xi32> to vector<8x1xi32>
    %393 = vector.broadcast %392 : vector<8x1xi32> to vector<8x128xi32>
    %394 = arith.select %391, %393, %364 : vector<8x128xi1>, vector<8x128xi32>
    %395 = vector.shape_cast %379 : vector<8x1xi32> to vector<8x1xi32>
    %396 = vector.broadcast %395 : vector<8x1xi32> to vector<8x128xi32>
    %397 = arith.select %391, %396, %367 : vector<8x128xi1>, vector<8x128xi32>
    %c2147483647_i32_83 = arith.constant 2147483647 : i32
    %398 = vector.broadcast %c2147483647_i32_83 : i32 to vector<8x128xi32>
    %399 = arith.select %375, %398, %369 : vector<8x128xi1>, vector<8x128xi32>
    %c12_i32 = arith.constant 12 : i32
    %cst_84 = arith.constant dense<2147483647> : vector<8xi32>
    %400 = vector.multi_reduction <minsi>, %399, %cst_84 [1] : vector<8x128xi32> to vector<8xi32>
    %401 = vector.shape_cast %400 : vector<8xi32> to vector<8x1xi32>
    %c127_i32_85 = arith.constant 127 : i32
    %402 = vector.broadcast %c127_i32_85 : i32 to vector<8x1xi32>
    %403 = arith.andi %401, %402 : vector<8x1xi32>
    %404 = vector.broadcast %403 : vector<8x1xi32> to vector<8x128xi32>
    %405 = arith.cmpi eq, %0, %404 : vector<8x128xi32>
    %c0_i32_86 = arith.constant 0 : i32
    %406 = vector.broadcast %c0_i32_86 : i32 to vector<8x128xi32>
    %407 = arith.select %405, %4, %406 : vector<8x128xi1>, vector<8x128xi32>
    %cst_87 = arith.constant dense<0> : vector<8xi32>
    %408 = vector.multi_reduction <add>, %407, %cst_87 [1] : vector<8x128xi32> to vector<8xi32>
    %409 = vector.shape_cast %408 : vector<8xi32> to vector<8x1xi32>
    %410 = vector.broadcast %c12_i32 : i32 to vector<8x1xi32>
    %411 = arith.cmpi slt, %410, %30 : vector<8x1xi32>
    %c2147483647_i32_88 = arith.constant 2147483647 : i32
    %412 = vector.broadcast %c2147483647_i32_88 : i32 to vector<8x1xi32>
    %413 = arith.cmpi slt, %401, %412 : vector<8x1xi32>
    %414 = arith.andi %411, %413 : vector<8x1xi1>
    %415 = vector.broadcast %414 : vector<8x1xi1> to vector<8x128xi1>
    %416 = arith.andi %405, %415 : vector<8x128xi1>
    %417 = arith.ori %387, %416 : vector<8x128xi1>
    %418 = vector.broadcast %c12_i32 : i32 to vector<8x128xi32>
    %419 = arith.cmpi eq, %1, %418 : vector<8x128xi32>
    %420 = vector.broadcast %414 : vector<8x1xi1> to vector<8x128xi1>
    %421 = arith.andi %419, %420 : vector<8x128xi1>
    %422 = vector.shape_cast %403 : vector<8x1xi32> to vector<8x1xi32>
    %423 = vector.broadcast %422 : vector<8x1xi32> to vector<8x128xi32>
    %424 = arith.select %421, %423, %394 : vector<8x128xi1>, vector<8x128xi32>
    %425 = vector.shape_cast %409 : vector<8x1xi32> to vector<8x1xi32>
    %426 = vector.broadcast %425 : vector<8x1xi32> to vector<8x128xi32>
    %427 = arith.select %421, %426, %397 : vector<8x128xi1>, vector<8x128xi32>
    %c2147483647_i32_89 = arith.constant 2147483647 : i32
    %428 = vector.broadcast %c2147483647_i32_89 : i32 to vector<8x128xi32>
    %429 = arith.select %405, %428, %399 : vector<8x128xi1>, vector<8x128xi32>
    %c13_i32 = arith.constant 13 : i32
    %cst_90 = arith.constant dense<2147483647> : vector<8xi32>
    %430 = vector.multi_reduction <minsi>, %429, %cst_90 [1] : vector<8x128xi32> to vector<8xi32>
    %431 = vector.shape_cast %430 : vector<8xi32> to vector<8x1xi32>
    %c127_i32_91 = arith.constant 127 : i32
    %432 = vector.broadcast %c127_i32_91 : i32 to vector<8x1xi32>
    %433 = arith.andi %431, %432 : vector<8x1xi32>
    %434 = vector.broadcast %433 : vector<8x1xi32> to vector<8x128xi32>
    %435 = arith.cmpi eq, %0, %434 : vector<8x128xi32>
    %c0_i32_92 = arith.constant 0 : i32
    %436 = vector.broadcast %c0_i32_92 : i32 to vector<8x128xi32>
    %437 = arith.select %435, %4, %436 : vector<8x128xi1>, vector<8x128xi32>
    %cst_93 = arith.constant dense<0> : vector<8xi32>
    %438 = vector.multi_reduction <add>, %437, %cst_93 [1] : vector<8x128xi32> to vector<8xi32>
    %439 = vector.shape_cast %438 : vector<8xi32> to vector<8x1xi32>
    %440 = vector.broadcast %c13_i32 : i32 to vector<8x1xi32>
    %441 = arith.cmpi slt, %440, %30 : vector<8x1xi32>
    %c2147483647_i32_94 = arith.constant 2147483647 : i32
    %442 = vector.broadcast %c2147483647_i32_94 : i32 to vector<8x1xi32>
    %443 = arith.cmpi slt, %431, %442 : vector<8x1xi32>
    %444 = arith.andi %441, %443 : vector<8x1xi1>
    %445 = vector.broadcast %444 : vector<8x1xi1> to vector<8x128xi1>
    %446 = arith.andi %435, %445 : vector<8x128xi1>
    %447 = arith.ori %417, %446 : vector<8x128xi1>
    %448 = vector.broadcast %c13_i32 : i32 to vector<8x128xi32>
    %449 = arith.cmpi eq, %1, %448 : vector<8x128xi32>
    %450 = vector.broadcast %444 : vector<8x1xi1> to vector<8x128xi1>
    %451 = arith.andi %449, %450 : vector<8x128xi1>
    %452 = vector.shape_cast %433 : vector<8x1xi32> to vector<8x1xi32>
    %453 = vector.broadcast %452 : vector<8x1xi32> to vector<8x128xi32>
    %454 = arith.select %451, %453, %424 : vector<8x128xi1>, vector<8x128xi32>
    %455 = vector.shape_cast %439 : vector<8x1xi32> to vector<8x1xi32>
    %456 = vector.broadcast %455 : vector<8x1xi32> to vector<8x128xi32>
    %457 = arith.select %451, %456, %427 : vector<8x128xi1>, vector<8x128xi32>
    %c2147483647_i32_95 = arith.constant 2147483647 : i32
    %458 = vector.broadcast %c2147483647_i32_95 : i32 to vector<8x128xi32>
    %459 = arith.select %435, %458, %429 : vector<8x128xi1>, vector<8x128xi32>
    %c14_i32 = arith.constant 14 : i32
    %cst_96 = arith.constant dense<2147483647> : vector<8xi32>
    %460 = vector.multi_reduction <minsi>, %459, %cst_96 [1] : vector<8x128xi32> to vector<8xi32>
    %461 = vector.shape_cast %460 : vector<8xi32> to vector<8x1xi32>
    %c127_i32_97 = arith.constant 127 : i32
    %462 = vector.broadcast %c127_i32_97 : i32 to vector<8x1xi32>
    %463 = arith.andi %461, %462 : vector<8x1xi32>
    %464 = vector.broadcast %463 : vector<8x1xi32> to vector<8x128xi32>
    %465 = arith.cmpi eq, %0, %464 : vector<8x128xi32>
    %c0_i32_98 = arith.constant 0 : i32
    %466 = vector.broadcast %c0_i32_98 : i32 to vector<8x128xi32>
    %467 = arith.select %465, %4, %466 : vector<8x128xi1>, vector<8x128xi32>
    %cst_99 = arith.constant dense<0> : vector<8xi32>
    %468 = vector.multi_reduction <add>, %467, %cst_99 [1] : vector<8x128xi32> to vector<8xi32>
    %469 = vector.shape_cast %468 : vector<8xi32> to vector<8x1xi32>
    %470 = vector.broadcast %c14_i32 : i32 to vector<8x1xi32>
    %471 = arith.cmpi slt, %470, %30 : vector<8x1xi32>
    %c2147483647_i32_100 = arith.constant 2147483647 : i32
    %472 = vector.broadcast %c2147483647_i32_100 : i32 to vector<8x1xi32>
    %473 = arith.cmpi slt, %461, %472 : vector<8x1xi32>
    %474 = arith.andi %471, %473 : vector<8x1xi1>
    %475 = vector.broadcast %474 : vector<8x1xi1> to vector<8x128xi1>
    %476 = arith.andi %465, %475 : vector<8x128xi1>
    %477 = arith.ori %447, %476 : vector<8x128xi1>
    %478 = vector.broadcast %c14_i32 : i32 to vector<8x128xi32>
    %479 = arith.cmpi eq, %1, %478 : vector<8x128xi32>
    %480 = vector.broadcast %474 : vector<8x1xi1> to vector<8x128xi1>
    %481 = arith.andi %479, %480 : vector<8x128xi1>
    %482 = vector.shape_cast %463 : vector<8x1xi32> to vector<8x1xi32>
    %483 = vector.broadcast %482 : vector<8x1xi32> to vector<8x128xi32>
    %484 = arith.select %481, %483, %454 : vector<8x128xi1>, vector<8x128xi32>
    %485 = vector.shape_cast %469 : vector<8x1xi32> to vector<8x1xi32>
    %486 = vector.broadcast %485 : vector<8x1xi32> to vector<8x128xi32>
    %487 = arith.select %481, %486, %457 : vector<8x128xi1>, vector<8x128xi32>
    %c2147483647_i32_101 = arith.constant 2147483647 : i32
    %488 = vector.broadcast %c2147483647_i32_101 : i32 to vector<8x128xi32>
    %489 = arith.select %465, %488, %459 : vector<8x128xi1>, vector<8x128xi32>
    %c15_i32 = arith.constant 15 : i32
    %cst_102 = arith.constant dense<2147483647> : vector<8xi32>
    %490 = vector.multi_reduction <minsi>, %489, %cst_102 [1] : vector<8x128xi32> to vector<8xi32>
    %491 = vector.shape_cast %490 : vector<8xi32> to vector<8x1xi32>
    %c127_i32_103 = arith.constant 127 : i32
    %492 = vector.broadcast %c127_i32_103 : i32 to vector<8x1xi32>
    %493 = arith.andi %491, %492 : vector<8x1xi32>
    %494 = vector.broadcast %493 : vector<8x1xi32> to vector<8x128xi32>
    %495 = arith.cmpi eq, %0, %494 : vector<8x128xi32>
    %c0_i32_104 = arith.constant 0 : i32
    %496 = vector.broadcast %c0_i32_104 : i32 to vector<8x128xi32>
    %497 = arith.select %495, %4, %496 : vector<8x128xi1>, vector<8x128xi32>
    %cst_105 = arith.constant dense<0> : vector<8xi32>
    %498 = vector.multi_reduction <add>, %497, %cst_105 [1] : vector<8x128xi32> to vector<8xi32>
    %499 = vector.shape_cast %498 : vector<8xi32> to vector<8x1xi32>
    %500 = vector.broadcast %c15_i32 : i32 to vector<8x1xi32>
    %501 = arith.cmpi slt, %500, %30 : vector<8x1xi32>
    %c2147483647_i32_106 = arith.constant 2147483647 : i32
    %502 = vector.broadcast %c2147483647_i32_106 : i32 to vector<8x1xi32>
    %503 = arith.cmpi slt, %491, %502 : vector<8x1xi32>
    %504 = arith.andi %501, %503 : vector<8x1xi1>
    %505 = vector.broadcast %504 : vector<8x1xi1> to vector<8x128xi1>
    %506 = arith.andi %495, %505 : vector<8x128xi1>
    %507 = arith.ori %477, %506 : vector<8x128xi1>
    %508 = vector.broadcast %c15_i32 : i32 to vector<8x128xi32>
    %509 = arith.cmpi eq, %1, %508 : vector<8x128xi32>
    %510 = vector.broadcast %504 : vector<8x1xi1> to vector<8x128xi1>
    %511 = arith.andi %509, %510 : vector<8x128xi1>
    %512 = vector.shape_cast %493 : vector<8x1xi32> to vector<8x1xi32>
    %513 = vector.broadcast %512 : vector<8x1xi32> to vector<8x128xi32>
    %514 = arith.select %511, %513, %484 : vector<8x128xi1>, vector<8x128xi32>
    %515 = vector.shape_cast %499 : vector<8x1xi32> to vector<8x1xi32>
    %516 = vector.broadcast %515 : vector<8x1xi32> to vector<8x128xi32>
    %517 = arith.select %511, %516, %487 : vector<8x128xi1>, vector<8x128xi32>
    %c2147483647_i32_107 = arith.constant 2147483647 : i32
    %518 = vector.broadcast %c2147483647_i32_107 : i32 to vector<8x128xi32>
    %519 = arith.select %495, %518, %489 : vector<8x128xi1>, vector<8x128xi32>
    %c16_i32 = arith.constant 16 : i32
    %cst_108 = arith.constant dense<2147483647> : vector<8xi32>
    %520 = vector.multi_reduction <minsi>, %519, %cst_108 [1] : vector<8x128xi32> to vector<8xi32>
    %521 = vector.shape_cast %520 : vector<8xi32> to vector<8x1xi32>
    %c127_i32_109 = arith.constant 127 : i32
    %522 = vector.broadcast %c127_i32_109 : i32 to vector<8x1xi32>
    %523 = arith.andi %521, %522 : vector<8x1xi32>
    %524 = vector.broadcast %523 : vector<8x1xi32> to vector<8x128xi32>
    %525 = arith.cmpi eq, %0, %524 : vector<8x128xi32>
    %c0_i32_110 = arith.constant 0 : i32
    %526 = vector.broadcast %c0_i32_110 : i32 to vector<8x128xi32>
    %527 = arith.select %525, %4, %526 : vector<8x128xi1>, vector<8x128xi32>
    %cst_111 = arith.constant dense<0> : vector<8xi32>
    %528 = vector.multi_reduction <add>, %527, %cst_111 [1] : vector<8x128xi32> to vector<8xi32>
    %529 = vector.shape_cast %528 : vector<8xi32> to vector<8x1xi32>
    %530 = vector.broadcast %c16_i32 : i32 to vector<8x1xi32>
    %531 = arith.cmpi slt, %530, %30 : vector<8x1xi32>
    %c2147483647_i32_112 = arith.constant 2147483647 : i32
    %532 = vector.broadcast %c2147483647_i32_112 : i32 to vector<8x1xi32>
    %533 = arith.cmpi slt, %521, %532 : vector<8x1xi32>
    %534 = arith.andi %531, %533 : vector<8x1xi1>
    %535 = vector.broadcast %534 : vector<8x1xi1> to vector<8x128xi1>
    %536 = arith.andi %525, %535 : vector<8x128xi1>
    %537 = arith.ori %507, %536 : vector<8x128xi1>
    %538 = vector.broadcast %c16_i32 : i32 to vector<8x128xi32>
    %539 = arith.cmpi eq, %1, %538 : vector<8x128xi32>
    %540 = vector.broadcast %534 : vector<8x1xi1> to vector<8x128xi1>
    %541 = arith.andi %539, %540 : vector<8x128xi1>
    %542 = vector.shape_cast %523 : vector<8x1xi32> to vector<8x1xi32>
    %543 = vector.broadcast %542 : vector<8x1xi32> to vector<8x128xi32>
    %544 = arith.select %541, %543, %514 : vector<8x128xi1>, vector<8x128xi32>
    %545 = vector.shape_cast %529 : vector<8x1xi32> to vector<8x1xi32>
    %546 = vector.broadcast %545 : vector<8x1xi32> to vector<8x128xi32>
    %547 = arith.select %541, %546, %517 : vector<8x128xi1>, vector<8x128xi32>
    %c2147483647_i32_113 = arith.constant 2147483647 : i32
    %548 = vector.broadcast %c2147483647_i32_113 : i32 to vector<8x128xi32>
    %549 = arith.select %525, %548, %519 : vector<8x128xi1>, vector<8x128xi32>
    %c17_i32 = arith.constant 17 : i32
    %cst_114 = arith.constant dense<2147483647> : vector<8xi32>
    %550 = vector.multi_reduction <minsi>, %549, %cst_114 [1] : vector<8x128xi32> to vector<8xi32>
    %551 = vector.shape_cast %550 : vector<8xi32> to vector<8x1xi32>
    %c127_i32_115 = arith.constant 127 : i32
    %552 = vector.broadcast %c127_i32_115 : i32 to vector<8x1xi32>
    %553 = arith.andi %551, %552 : vector<8x1xi32>
    %554 = vector.broadcast %553 : vector<8x1xi32> to vector<8x128xi32>
    %555 = arith.cmpi eq, %0, %554 : vector<8x128xi32>
    %c0_i32_116 = arith.constant 0 : i32
    %556 = vector.broadcast %c0_i32_116 : i32 to vector<8x128xi32>
    %557 = arith.select %555, %4, %556 : vector<8x128xi1>, vector<8x128xi32>
    %cst_117 = arith.constant dense<0> : vector<8xi32>
    %558 = vector.multi_reduction <add>, %557, %cst_117 [1] : vector<8x128xi32> to vector<8xi32>
    %559 = vector.shape_cast %558 : vector<8xi32> to vector<8x1xi32>
    %560 = vector.broadcast %c17_i32 : i32 to vector<8x1xi32>
    %561 = arith.cmpi slt, %560, %30 : vector<8x1xi32>
    %c2147483647_i32_118 = arith.constant 2147483647 : i32
    %562 = vector.broadcast %c2147483647_i32_118 : i32 to vector<8x1xi32>
    %563 = arith.cmpi slt, %551, %562 : vector<8x1xi32>
    %564 = arith.andi %561, %563 : vector<8x1xi1>
    %565 = vector.broadcast %564 : vector<8x1xi1> to vector<8x128xi1>
    %566 = arith.andi %555, %565 : vector<8x128xi1>
    %567 = arith.ori %537, %566 : vector<8x128xi1>
    %568 = vector.broadcast %c17_i32 : i32 to vector<8x128xi32>
    %569 = arith.cmpi eq, %1, %568 : vector<8x128xi32>
    %570 = vector.broadcast %564 : vector<8x1xi1> to vector<8x128xi1>
    %571 = arith.andi %569, %570 : vector<8x128xi1>
    %572 = vector.shape_cast %553 : vector<8x1xi32> to vector<8x1xi32>
    %573 = vector.broadcast %572 : vector<8x1xi32> to vector<8x128xi32>
    %574 = arith.select %571, %573, %544 : vector<8x128xi1>, vector<8x128xi32>
    %575 = vector.shape_cast %559 : vector<8x1xi32> to vector<8x1xi32>
    %576 = vector.broadcast %575 : vector<8x1xi32> to vector<8x128xi32>
    %577 = arith.select %571, %576, %547 : vector<8x128xi1>, vector<8x128xi32>
    %c2147483647_i32_119 = arith.constant 2147483647 : i32
    %578 = vector.broadcast %c2147483647_i32_119 : i32 to vector<8x128xi32>
    %579 = arith.select %555, %578, %549 : vector<8x128xi1>, vector<8x128xi32>
    %c18_i32 = arith.constant 18 : i32
    %cst_120 = arith.constant dense<2147483647> : vector<8xi32>
    %580 = vector.multi_reduction <minsi>, %579, %cst_120 [1] : vector<8x128xi32> to vector<8xi32>
    %581 = vector.shape_cast %580 : vector<8xi32> to vector<8x1xi32>
    %c127_i32_121 = arith.constant 127 : i32
    %582 = vector.broadcast %c127_i32_121 : i32 to vector<8x1xi32>
    %583 = arith.andi %581, %582 : vector<8x1xi32>
    %584 = vector.broadcast %583 : vector<8x1xi32> to vector<8x128xi32>
    %585 = arith.cmpi eq, %0, %584 : vector<8x128xi32>
    %c0_i32_122 = arith.constant 0 : i32
    %586 = vector.broadcast %c0_i32_122 : i32 to vector<8x128xi32>
    %587 = arith.select %585, %4, %586 : vector<8x128xi1>, vector<8x128xi32>
    %cst_123 = arith.constant dense<0> : vector<8xi32>
    %588 = vector.multi_reduction <add>, %587, %cst_123 [1] : vector<8x128xi32> to vector<8xi32>
    %589 = vector.shape_cast %588 : vector<8xi32> to vector<8x1xi32>
    %590 = vector.broadcast %c18_i32 : i32 to vector<8x1xi32>
    %591 = arith.cmpi slt, %590, %30 : vector<8x1xi32>
    %c2147483647_i32_124 = arith.constant 2147483647 : i32
    %592 = vector.broadcast %c2147483647_i32_124 : i32 to vector<8x1xi32>
    %593 = arith.cmpi slt, %581, %592 : vector<8x1xi32>
    %594 = arith.andi %591, %593 : vector<8x1xi1>
    %595 = vector.broadcast %594 : vector<8x1xi1> to vector<8x128xi1>
    %596 = arith.andi %585, %595 : vector<8x128xi1>
    %597 = arith.ori %567, %596 : vector<8x128xi1>
    %598 = vector.broadcast %c18_i32 : i32 to vector<8x128xi32>
    %599 = arith.cmpi eq, %1, %598 : vector<8x128xi32>
    %600 = vector.broadcast %594 : vector<8x1xi1> to vector<8x128xi1>
    %601 = arith.andi %599, %600 : vector<8x128xi1>
    %602 = vector.shape_cast %583 : vector<8x1xi32> to vector<8x1xi32>
    %603 = vector.broadcast %602 : vector<8x1xi32> to vector<8x128xi32>
    %604 = arith.select %601, %603, %574 : vector<8x128xi1>, vector<8x128xi32>
    %605 = vector.shape_cast %589 : vector<8x1xi32> to vector<8x1xi32>
    %606 = vector.broadcast %605 : vector<8x1xi32> to vector<8x128xi32>
    %607 = arith.select %601, %606, %577 : vector<8x128xi1>, vector<8x128xi32>
    %c2147483647_i32_125 = arith.constant 2147483647 : i32
    %608 = vector.broadcast %c2147483647_i32_125 : i32 to vector<8x128xi32>
    %609 = arith.select %585, %608, %579 : vector<8x128xi1>, vector<8x128xi32>
    %c19_i32 = arith.constant 19 : i32
    %cst_126 = arith.constant dense<2147483647> : vector<8xi32>
    %610 = vector.multi_reduction <minsi>, %609, %cst_126 [1] : vector<8x128xi32> to vector<8xi32>
    %611 = vector.shape_cast %610 : vector<8xi32> to vector<8x1xi32>
    %c127_i32_127 = arith.constant 127 : i32
    %612 = vector.broadcast %c127_i32_127 : i32 to vector<8x1xi32>
    %613 = arith.andi %611, %612 : vector<8x1xi32>
    %614 = vector.broadcast %613 : vector<8x1xi32> to vector<8x128xi32>
    %615 = arith.cmpi eq, %0, %614 : vector<8x128xi32>
    %c0_i32_128 = arith.constant 0 : i32
    %616 = vector.broadcast %c0_i32_128 : i32 to vector<8x128xi32>
    %617 = arith.select %615, %4, %616 : vector<8x128xi1>, vector<8x128xi32>
    %cst_129 = arith.constant dense<0> : vector<8xi32>
    %618 = vector.multi_reduction <add>, %617, %cst_129 [1] : vector<8x128xi32> to vector<8xi32>
    %619 = vector.shape_cast %618 : vector<8xi32> to vector<8x1xi32>
    %620 = vector.broadcast %c19_i32 : i32 to vector<8x1xi32>
    %621 = arith.cmpi slt, %620, %30 : vector<8x1xi32>
    %c2147483647_i32_130 = arith.constant 2147483647 : i32
    %622 = vector.broadcast %c2147483647_i32_130 : i32 to vector<8x1xi32>
    %623 = arith.cmpi slt, %611, %622 : vector<8x1xi32>
    %624 = arith.andi %621, %623 : vector<8x1xi1>
    %625 = vector.broadcast %624 : vector<8x1xi1> to vector<8x128xi1>
    %626 = arith.andi %615, %625 : vector<8x128xi1>
    %627 = arith.ori %597, %626 : vector<8x128xi1>
    %628 = vector.broadcast %c19_i32 : i32 to vector<8x128xi32>
    %629 = arith.cmpi eq, %1, %628 : vector<8x128xi32>
    %630 = vector.broadcast %624 : vector<8x1xi1> to vector<8x128xi1>
    %631 = arith.andi %629, %630 : vector<8x128xi1>
    %632 = vector.shape_cast %613 : vector<8x1xi32> to vector<8x1xi32>
    %633 = vector.broadcast %632 : vector<8x1xi32> to vector<8x128xi32>
    %634 = arith.select %631, %633, %604 : vector<8x128xi1>, vector<8x128xi32>
    %635 = vector.shape_cast %619 : vector<8x1xi32> to vector<8x1xi32>
    %636 = vector.broadcast %635 : vector<8x1xi32> to vector<8x128xi32>
    %637 = arith.select %631, %636, %607 : vector<8x128xi1>, vector<8x128xi32>
    %c2147483647_i32_131 = arith.constant 2147483647 : i32
    %638 = vector.broadcast %c2147483647_i32_131 : i32 to vector<8x128xi32>
    %639 = arith.select %615, %638, %609 : vector<8x128xi1>, vector<8x128xi32>
    %c20_i32_132 = arith.constant 20 : i32
    %c50264_i32 = arith.constant 50264 : i32
    %640 = vector.broadcast %c50264_i32 : i32 to vector<8x128xi32>
    %641 = arith.select %627, %640, %4 : vector<8x128xi1>, vector<8x128xi32>
    %642 = arith.index_cast %c0_i32 : i32 to index
    %c0_133 = arith.constant 0 : index
    %c0_134 = arith.constant 0 : index
    %643 = vector.load %arg3[%642, %c0_133, %c0_134] : memref<1x8x128xi32, #tpu.memory_space<vmem>>, vector<1x8x128xi32>
    %644 = vector.shape_cast %643 : vector<1x8x128xi32> to vector<8x128xi32>
    %645 = vector.shape_cast %641 : vector<8x128xi32> to vector<1x8x128xi32>
    tpu.vector_store %arg3[%642, %c0_133, %c0_134], %645 {strides = array<i32>} : memref<1x8x128xi32, #tpu.memory_space<vmem>>, vector<1x8x128xi32>,
    %c16_i32_135 = arith.constant 16 : i32
    %646 = vector.broadcast %c16_i32_135 : i32 to vector<8x128xi32>
    %647 = arith.shli %634, %646 : vector<8x128xi32>
    %648 = arith.ori %647, %637 : vector<8x128xi32>
    %649 = arith.index_cast %c0_i32 : i32 to index
    %c0_136 = arith.constant 0 : index
    %c0_137 = arith.constant 0 : index
    %650 = vector.load %arg4[%649, %c0_136, %c0_137] : memref<1x8x128xi32, #tpu.memory_space<vmem>>, vector<1x8x128xi32>
    %651 = vector.shape_cast %650 : vector<1x8x128xi32> to vector<8x128xi32>
    %652 = vector.shape_cast %648 : vector<8x128xi32> to vector<1x8x128xi32>
    tpu.vector_store %arg4[%649, %c0_136, %c0_137], %652 {strides = array<i32>} : memref<1x8x128xi32, #tpu.memory_space<vmem>>, vector<1x8x128xi32>,
    %c1_i32_138 = arith.constant 1 : i32
    return
  }
  func.func @transform_0(%arg0: i32) -> (i32, i32, i32) {
    %c0_i32 = arith.constant 0 : i32
    %c0_i32_0 = arith.constant 0 : i32
    %c0_i32_1 = arith.constant 0 : i32
    return %arg0, %c0_i32, %c0_i32_0 : i32, i32, i32
  }
  func.func @transform_1(%arg0: i32) -> (i32, i32, i32) {
    %c0_i32 = arith.constant 0 : i32
    %c0_i32_0 = arith.constant 0 : i32
    %c0_i32_1 = arith.constant 0 : i32
    return %arg0, %c0_i32, %c0_i32_0 : i32, i32, i32
  }
  func.func @transform_2(%arg0: i32) -> (i32, i32, i32) {
    %c0_i32 = arith.constant 0 : i32
    %c0_i32_0 = arith.constant 0 : i32
    %c0_i32_1 = arith.constant 0 : i32
    return %arg0, %c0_i32, %c0_i32_0 : i32, i32, i32
  }
  func.func @transform_3(%arg0: i32) -> (i32, i32, i32) {
    %c0_i32 = arith.constant 0 : i32
    %c0_i32_0 = arith.constant 0 : i32
    %c0_i32_1 = arith.constant 0 : i32
    return %arg0, %c0_i32, %c0_i32_0 : i32, i32, i32
  }
}

</mosaic_0001>

<llo_original>
// kernel: features_mlm_forward.1
$region0: #{features_mlm_forward.1}
  #allocation0 [shape = 'u32[]', space=smem, size = 0x4, offset = 0x4, fixed_abs, tag = 'smem constant byte address 0x4 - core index']
  #allocation1 [shape = 'u32[144,128]{1,0:T(1,128)}', space=vmem, size = 0x12000, scoped, tag = 'internal scratch']
  %s0 = inlined_call_operand.hbm [shape: s32[2,8,128], index: 0, kind: input, shape index: {}]
  %s1 = inlined_call_operand.hbm [shape: f32[2,8,128], index: 1, kind: input, shape index: {}]
  %s2 = inlined_call_operand.hbm [shape: s32[2,8,128], index: 2, kind: output, shape index: {0}]
  %s3 = inlined_call_operand.vmem [shape: s32[2,8,128], index: 3, kind: output, shape index: {1}]
  %4 = xla_tuple %s2, %s3
  %s5 = sld [smem:[#allocation0]]
  $region57: #{features_mlm_forward.1} parent=0
    _
  %s7 = ssub.s32 1, %s5
  %s8 = scalar_select 0, %s7, %s5
  $region1: #{features_mlm_forward.1} parent=0
    #allocation2 [shape = 'u8[8192]{0}', space=vmem, size = 0x2000, scoped, tag = 'input window, operand 0']
    #allocation3 [shape = 's32[2]{0}', space=sflag, size = 0x8, scoped, tag = 'scoped memory for features_mlm_forward.1']
    #allocation4 [shape = 's32[2]{0}', space=sflag, size = 0x8, scoped, tag = 'scoped memory for features_mlm_forward.1']
    #allocation5 [shape = 'u8[8192]{0}', space=vmem, size = 0x2000, scoped, tag = 'input window, operand 1']
    #allocation6 [shape = 's32[2]{0}', space=sflag, size = 0x8, scoped, tag = 'scoped memory for features_mlm_forward.1']
    #allocation7 [shape = 'u8[8192]{0}', space=vmem, size = 0x2000, scoped, tag = 'output window, operand 0']
    %9 = vsyncpa [#allocation3], 0
    %s10 = scalar_lea.sflag [#allocation3], 1
    %11 = vsyncpa %s10, 0
    %12 = vsyncpa [#allocation6], 0
    %s13 = scalar_lea.sflag [#allocation6], 1
    %14 = vsyncpa %s13, 0
    %15 = vsyncpa [#allocation4], 0
    %s16 = scalar_lea.sflag [#allocation4], 1
    %17 = vsyncpa %s16, 0
    loop: start=0, step=1, limit=4
    $region2: #{features_mlm_forward.1} parent=1 // loop_pre_header
      _
    $region3: #{features_mlm_forward.1} parent=1 // loop_header
      %s19 = sphi 0, %s23
      %p20 = scmp.ge.s32.totalorder %s19, 4
      %s29 = sphi 0, %s31
      %s32 = sphi 0, %s29
      %s33 = sphi 0, %s32
      %s49 = sphi 0, %s33
      %s55 = sphi 0, %s57
      %s58 = sphi 0, %s55
      %s59 = sphi 0, %s58
      %s75 = sphi 0, %s59
      %s81 = sphi 0, %s83
      %s84 = sphi 0, %s81
      %s85 = sphi 0, %s84
      %s101 = sphi 0, %s85
      %s107 = sphi 0, %s109
      %s110 = sphi 0, %s107
      %s111 = sphi 0, %s110
      %s127 = sphi 0, %s111
    $region4: #{features_mlm_forward.1} parent=1 // loop_header_branch
      %22 = sbr.rel (%p20) target = $region8
    $region5: #{features_mlm_forward.1} parent=1 // loop_body
      %s24 = ssub.s32 %s19, 1
      %s25 = ssub.s32 %s19, 2
      %s26 = sadd.s32 %s19, 1
      %s27 = ssub.s32 %s19, %s26
      %p28 = scmp.eq.s32.totalorder %s27, 0
      %s30 = sadd.s32 %s29, 1
      %s31 = scalar_select %p28, %s29, %s30
      %p34 = pneg %p28
      %p35 = scmp.eq.s32.totalorder %s19, 1
      %p36 = por %p34, %p35
      %p37 = scmp.ne.s32.totalorder %s29, %s32
      %p38 = scmp.eq.s32.totalorder %s19, 0
      %p39 = por %p37, %p38
      %p40 = scmp.ne.s32.totalorder %s29, %s32
      %p41 = scmp.eq.s32.totalorder %s24, 1
      %p42 = por %p40, %p41
      %p43 = scmp.ne.s32.totalorder %s32, %s33
      %p44 = scmp.eq.s32.totalorder %s24, 0
      %p45 = por %p43, %p44
      %p46 = scmp.ne.s32.totalorder %s32, %s33
      %p47 = scmp.eq.s32.totalorder %s25, 1
      %p48 = por %p46, %p47
      %p50 = scmp.ne.s32.totalorder %s33, %s49
      %p51 = scmp.eq.s32.totalorder %s25, 0
      %p52 = por %p50, %p51
      %s53 = ssub.s32 %s19, %s26
      %p54 = scmp.eq.s32.totalorder %s53, 0
      %s56 = sadd.s32 %s55, 1
      %s57 = scalar_select %p54, %s55, %s56
      %p60 = pneg %p54
      %p61 = scmp.eq.s32.totalorder %s19, 1
      %p62 = por %p60, %p61
      %p63 = scmp.ne.s32.totalorder %s55, %s58
      %p64 = scmp.eq.s32.totalorder %s19, 0
      %p65 = por %p63, %p64
      %p66 = scmp.ne.s32.totalorder %s55, %s58
      %p67 = scmp.eq.s32.totalorder %s24, 1
      %p68 = por %p66, %p67
      %p69 = scmp.ne.s32.totalorder %s58, %s59
      %p70 = scmp.eq.s32.totalorder %s24, 0
      %p71 = por %p69, %p70
      %p72 = scmp.ne.s32.totalorder %s58, %s59
      %p73 = scmp.eq.s32.totalorder %s25, 1
      %p74 = por %p72, %p73
      %p76 = scmp.ne.s32.totalorder %s59, %s75
      %p77 = scmp.eq.s32.totalorder %s25, 0
      %p78 = por %p76, %p77
      %s79 = ssub.s32 %s19, %s26
      %p80 = scmp.eq.s32.totalorder %s79, 0
      %s82 = sadd.s32 %s81, 1
      %s83 = scalar_select %p80, %s81, %s82
      %p86 = pneg %p80
      %p87 = scmp.eq.s32.totalorder %s19, 1
      %p88 = por %p86, %p87
      %p89 = scmp.ne.s32.totalorder %s81, %s84
      %p90 = scmp.eq.s32.totalorder %s19, 0
      %p91 = por %p89, %p90
      %p92 = scmp.ne.s32.totalorder %s81, %s84
      %p93 = scmp.eq.s32.totalorder %s24, 1
      %p94 = por %p92, %p93
      %p95 = scmp.ne.s32.totalorder %s84, %s85
      %p96 = scmp.eq.s32.totalorder %s24, 0
      %p97 = por %p95, %p96
      %p98 = scmp.ne.s32.totalorder %s84, %s85
      %p99 = scmp.eq.s32.totalorder %s25, 1
      %p100 = por %p98, %p99
      %p102 = scmp.ne.s32.totalorder %s85, %s101
      %p103 = scmp.eq.s32.totalorder %s25, 0
      %p104 = por %p102, %p103
      %s105 = ssub.s32 %s19, %s26
      %p106 = scmp.eq.s32.totalorder %s105, 0
      %s108 = sadd.s32 %s107, 1
      %s109 = scalar_select %p106, %s107, %s108
      %p112 = pneg %p106
      %p113 = scmp.eq.s32.totalorder %s19, 1
      %p114 = por %p112, %p113
      %p115 = scmp.ne.s32.totalorder %s107, %s110
      %p116 = scmp.eq.s32.totalorder %s19, 0
      %p117 = por %p115, %p116
      %p118 = scmp.ne.s32.totalorder %s107, %s110
      %p119 = scmp.eq.s32.totalorder %s24, 1
      %p120 = por %p118, %p119
      %p121 = scmp.ne.s32.totalorder %s110, %s111
      %p122 = scmp.eq.s32.totalorder %s24, 0
      %p123 = por %p121, %p122
      %p124 = scmp.ne.s32.totalorder %s110, %s111
      %p125 = scmp.eq.s32.totalorder %s25, 1
      %p126 = por %p124, %p125
      %p128 = scmp.ne.s32.totalorder %s111, %s127
      %p129 = scmp.eq.s32.totalorder %s25, 0
      %p130 = por %p128, %p129
      %p131 = scmp.le.s32.totalorder 1, %s19
      %p132 = scmp.lt.s32.totalorder %s19, 3
      %p133 = pnand %p131, %p132
      %p134 = pneg %p133
      // Predicated region
      $region9: #{features_mlm_forward.1} parent=5 // pred_check
        _
      $region10: #{features_mlm_forward.1} parent=5 // pred_check_branch
        %136 = sbr.rel (%p133) target = $region12
      $region11: #{features_mlm_forward.1} parent=5 // pred_region
        %s137 = ssub.s32 %s19, 1
      $region12: #{features_mlm_forward.1} parent=5 // pred_fallthru
        _
      %p138 = scmp.lt.s32.totalorder %s19, 2
      // Predicated region
      $region13: #{features_mlm_forward.1} parent=5 // pred_check
        %p139 = pneg %p138
      $region14: #{features_mlm_forward.1} parent=5 // pred_check_branch
        %141 = sbr.rel (%p139) target = $region16
      $region15: #{features_mlm_forward.1} parent=5 // pred_region
        // Predicated region
        $region17: #{features_mlm_forward.1} parent=15 // pred_check
          %p142 = pneg %p39
        $region18: #{features_mlm_forward.1} parent=15 // pred_check_branch
          %144 = sbr.rel (%p142) target = $region20
        $region19: #{features_mlm_forward.1} parent=15 // pred_region
          %s145 = sand.u32 %s29, 1
          %s146 = scalar_lea.sflag [#allocation3], %s145
          %s147 = sand.u32 %s29, 1
          %s148 = smul.addr %s147, 8
          %s149 = scalar_lea.vmem [#allocation2], %s148
          %s151 = ssub.s32 128, 128
          %152 = vsyncadd %s146, %s151
          %s153 = smul.addr %s19, 128
          %s154 = scalar_lea.hbm %s0, %s153
          %s156 = sshll.u32 %s149, 4
          %s157 = int_to_ptr.vmem [resolvable:$true] %s156
          %159 = dma.hbm_to_vmem [thread:$0]  %s154, 128, %s157, %s146
        $region20: #{features_mlm_forward.1} parent=15 // pred_fallthru
          _
        // Predicated region
        $region21: #{features_mlm_forward.1} parent=15 // pred_check
          %p160 = pneg %p65
        $region22: #{features_mlm_forward.1} parent=15 // pred_check_branch
          %162 = sbr.rel (%p160) target = $region24
        $region23: #{features_mlm_forward.1} parent=15 // pred_region
          %s163 = sand.u32 %s55, 1
          %s164 = scalar_lea.sflag [#allocation6], %s163
          %s165 = sand.u32 %s55, 1
          %s166 = smul.addr %s165, 8
          %s167 = scalar_lea.vmem [#allocation5], %s166
          %s169 = ssub.s32 128, 128
          %170 = vsyncadd %s164, %s169
          %s171 = smul.addr %s19, 128
          %s172 = scalar_lea.hbm %s1, %s171
          %s174 = sshll.u32 %s167, 4
          %s175 = int_to_ptr.vmem [resolvable:$true] %s174
          %177 = dma.hbm_to_vmem [thread:$0]  %s172, 128, %s175, %s164
        $region24: #{features_mlm_forward.1} parent=15 // pred_fallthru
          _
      $region16: #{features_mlm_forward.1} parent=5 // pred_fallthru
        _
      %p178 = scmp.le.s32.totalorder 1, %s19
      %p179 = scmp.lt.s32.totalorder %s19, 3
      %p180 = pnand %p178, %p179
      %p181 = pneg %p180
      // Predicated region
      $region25: #{features_mlm_forward.1} parent=5 // pred_check
        _
      $region26: #{features_mlm_forward.1} parent=5 // pred_check_branch
        %183 = sbr.rel (%p180) target = $region28
      $region27: #{features_mlm_forward.1} parent=5 // pred_region
        %s184 = ssub.s32 %s19, 1
        %s185 = sand.u32 %s32, 1
        %s186 = scalar_lea.sflag [#allocation3], %s185
        %s187 = sand.u32 %s32, 1
        %s188 = smul.addr %s187, 8
        %s189 = scalar_lea.vmem [#allocation2], %s188
        // Predicated region
        $region29: #{features_mlm_forward.1} parent=27 // pred_check
          %p190 = pneg %p45
        $region30: #{features_mlm_forward.1} parent=27 // pred_check_branch
          %192 = sbr.rel (%p190) target = $region32
        $region31: #{features_mlm_forward.1} parent=27 // pred_region
          %193 = dma.done %s186, 128
        $region32: #{features_mlm_forward.1} parent=27 // pred_fallthru
          _
        %s194 = sand.u32 %s58, 1
        %s195 = scalar_lea.sflag [#allocation6], %s194
        %s196 = sand.u32 %s58, 1
        %s197 = smul.addr %s196, 8
        %s198 = scalar_lea.vmem [#allocation5], %s197
        // Predicated region
        $region33: #{features_mlm_forward.1} parent=27 // pred_check
          %p199 = pneg %p71
        $region34: #{features_mlm_forward.1} parent=27 // pred_check_branch
          %201 = sbr.rel (%p199) target = $region36
        $region35: #{features_mlm_forward.1} parent=27 // pred_region
          %202 = dma.done %s195, 128
        $region36: #{features_mlm_forward.1} parent=27 // pred_fallthru
          _
        %s203 = sand.u32 %s32, 1
        %s204 = scalar_lea.sflag [#allocation3], %s203
        %s205 = sand.u32 %s32, 1
        %s206 = smul.addr %s205, 8
        %s207 = scalar_lea.vmem [#allocation2], %s206
        %p208 = pneg %p45
        %p209 = pneg %p42
        %s210 = sand.u32 %s58, 1
        %s211 = scalar_lea.sflag [#allocation6], %s210
        %s212 = sand.u32 %s58, 1
        %s213 = smul.addr %s212, 8
        %s214 = scalar_lea.vmem [#allocation5], %s213
        %p215 = pneg %p71
        %p216 = pneg %p68
        %p217 = pneg %p97
        %p218 = pneg %p94
        %s219 = sand.u32 %s84, 1
        %s220 = scalar_lea.sflag [#allocation4], %s219
        %s221 = sand.u32 %s84, 1
        %s222 = smul.addr %s221, 8
        %s223 = scalar_lea.vmem [#allocation7], %s222
        %p224 = pneg %p123
        %p225 = pneg %p120
        %p226 = scmp.lt.s32.totalorder %s24, 1
        %s227 = scalar_select %p226, %s24, 1
        %s228 = smul.addr %s227, 8
        %s229 = scalar_lea.vmem %s3, %s228
        %p230 = scmp.lt.s32.totalorder %s24, 1
        %s231 = scalar_select %p230, %s24, 1
        %s232 = smul.addr %s231, 8
        %s233 = scalar_lea.vmem %s3, %s232
        %v234 = vlaneseq
        %v235 = vand.u32 %v234, 127
        %v236 = vld [vmem:[%s189] sm:$0xff]
        %v237 = vld [vmem:[%s198] sm:$0xff]
        %vm238 = vcmp.ne.s32.totalorder %v236, 0
        %vm239 = vcmp.ne.s32.totalorder %v236, 1
        %vm240 = vmand %vm238, %vm239
        %vm241 = vcmp.ne.s32.totalorder %v236, 2
        %vm242 = vmand %vm240, %vm241
        %v243 = vsel %vm242, 1, 0
        %v244 = vand.u32 %v243, 65535
        %v245 = vshrl.u32 %v243, 16
        %v246 = vcvt.s32.f32 %v244
        %v247 = vcvt.s32.f32 %v245
        %248 = vadd.xlane.f32.xlu0 %v246
        %v249 = vpop.xlane.xlu0 %248
        %250 = vadd.xlane.f32.xlu0 %v247
        %v251 = vpop.xlane.xlu0 %250
        %v252 = vcvt.f32.s32 %v249
        %v253 = vcvt.f32.s32 %v251
        %v254 = vshll.u32 %v253, 16
        %v255 = vadd.s32 %v254, %v252
        %v256 = vshra.s32 %v255, 1
        %v257 = vand.u32 %v255, 1
        %v258 = vand.u32 %v256, 1
        %v259 = vand.u32 %v257, %v258
        %v260 = vadd.s32 %v256, %v259
        %vm261 = vcmp.gt.s32.totalorder %v260, 1
        %v262 = vsel %vm261, %v260, 1
        %vm263 = vcmp.lt.s32.totalorder %v262, 20
        %v264 = vsel %vm263, %v262, 20
        %v266 = vand.u32 %v237, 2147483520
        %v267 = vor.u32 %v266, %v235
        %v268 = vsel %vm242, %v267, 2147483647
        %v269 = vand.u32 %v268, 65535
        %v270 = vshra.s32 %v268, 16
        %v271 = vcvt.s32.f32 %v269
        %v272 = vcvt.s32.f32 %v270
        %273 = vmin.xlane.f32.xlu0 %v272
        %v274 = vpop.xlane.xlu0 %273
        %vm275 = vcmp.eq.f32.partialorder %v272, %v274
        %v276 = vsel %vm275, %v271, inf
        %277 = vmin.xlane.f32.xlu0 %v276
        %v278 = vpop.xlane.xlu0 %277
        %v279 = vcvt.f32.s32 %v278
        %v280 = vcvt.f32.s32 %v274
        %v281 = vshll.u32 %v280, 16
        %v282 = vadd.s32 %v281, %v279
        %v283 = vand.u32 %v282, 127
        %vm284 = vcmp.eq.s32.totalorder %v235, %v283
        %v285 = vsel %vm284, %v236, 0
        %v286 = vand.u32 %v285, 65535
        %v287 = vshrl.u32 %v285, 16
        %v288 = vcvt.s32.f32 %v286
        %v289 = vcvt.s32.f32 %v287
        %290 = vadd.xlane.f32.xlu0 %v288
        %v291 = vpop.xlane.xlu0 %290
        %292 = vadd.xlane.f32.xlu0 %v289
        %v293 = vpop.xlane.xlu0 %292
        %v294 = vcvt.f32.s32 %v291
        %v295 = vcvt.f32.s32 %v293
        %v296 = vshll.u32 %v295, 16
        %v297 = vadd.s32 %v296, %v294
        %vm298 = vcmp.gt.s32.totalorder %v264, 0
        %vm299 = vcmp.lt.s32.totalorder %v282, 2147483647
        %vm300 = vmand %vm298, %vm299
        %v301 = vsel %vm300, 1, 0
        %vm302 = vcmp.eq.s32.totalorder %v301, 1
        %vm303 = vmand %vm284, %vm302
        %vm304 = vcmp.eq.s32.totalorder %v235, 0
        %vm305 = vmand %vm304, %vm302
        %v306 = vsel %vm305, %v283, 0
        %v307 = vsel %vm305, %v297, 0
        %v308 = vsel %vm284, 2147483647, %v268
        %v309 = vand.u32 %v308, 65535
        %v310 = vshra.s32 %v308, 16
        %v311 = vcvt.s32.f32 %v309
        %v312 = vcvt.s32.f32 %v310
        %313 = vmin.xlane.f32.xlu0 %v312
        %v314 = vpop.xlane.xlu0 %313
        %vm315 = vcmp.eq.f32.partialorder %v312, %v314
        %v316 = vsel %vm315, %v311, inf
        %317 = vmin.xlane.f32.xlu0 %v316
        %v318 = vpop.xlane.xlu0 %317
        %v319 = vcvt.f32.s32 %v318
        %v320 = vcvt.f32.s32 %v314
        %v321 = vshll.u32 %v320, 16
        %v322 = vadd.s32 %v321, %v319
        %v323 = vand.u32 %v322, 127
        %vm324 = vcmp.eq.s32.totalorder %v235, %v323
        %v325 = vsel %vm324, %v236, 0
        %v326 = vand.u32 %v325, 65535
        %v327 = vshrl.u32 %v325, 16
        %v328 = vcvt.s32.f32 %v326
        %v329 = vcvt.s32.f32 %v327
        %330 = vadd.xlane.f32.xlu0 %v328
        %v331 = vpop.xlane.xlu0 %330
        %332 = vadd.xlane.f32.xlu0 %v329
        %v333 = vpop.xlane.xlu0 %332
        %v334 = vcvt.f32.s32 %v331
        %v335 = vcvt.f32.s32 %v333
        %v336 = vshll.u32 %v335, 16
        %v337 = vadd.s32 %v336, %v334
        %vm338 = vcmp.gt.s32.totalorder %v264, 1
        %vm339 = vcmp.lt.s32.totalorder %v322, 2147483647
        %vm340 = vmand %vm338, %vm339
        %v341 = vsel %vm340, 1, 0
        %vm342 = vcmp.eq.s32.totalorder %v341, 1
        %vm343 = vmand %vm324, %vm342
        %vm344 = vmor %vm303, %vm343
        %vm345 = vcmp.eq.s32.totalorder %v235, 1
        %vm346 = vmand %vm345, %vm342
        %v347 = vsel %vm346, %v323, %v306
        %v348 = vsel %vm346, %v337, %v307
        %v349 = vsel %vm324, 2147483647, %v308
        %v350 = vand.u32 %v349, 65535
        %v351 = vshra.s32 %v349, 16
        %v352 = vcvt.s32.f32 %v350
        %v353 = vcvt.s32.f32 %v351
        %354 = vmin.xlane.f32.xlu0 %v353
        %v355 = vpop.xlane.xlu0 %354
        %vm356 = vcmp.eq.f32.partialorder %v353, %v355
        %v357 = vsel %vm356, %v352, inf
        %358 = vmin.xlane.f32.xlu0 %v357
        %v359 = vpop.xlane.xlu0 %358
        %v360 = vcvt.f32.s32 %v359
        %v361 = vcvt.f32.s32 %v355
        %v362 = vshll.u32 %v361, 16
        %v363 = vadd.s32 %v362, %v360
        %v364 = vand.u32 %v363, 127
        %vm365 = vcmp.eq.s32.totalorder %v235, %v364
        %v366 = vsel %vm365, %v236, 0
        %v367 = vand.u32 %v366, 65535
        %v368 = vshrl.u32 %v366, 16
        %v369 = vcvt.s32.f32 %v367
        %v370 = vcvt.s32.f32 %v368
        %371 = vadd.xlane.f32.xlu0 %v369
        %v372 = vpop.xlane.xlu0 %371
        %373 = vadd.xlane.f32.xlu0 %v370
        %v374 = vpop.xlane.xlu0 %373
        %v375 = vcvt.f32.s32 %v372
        %v376 = vcvt.f32.s32 %v374
        %v377 = vshll.u32 %v376, 16
        %v378 = vadd.s32 %v377, %v375
        %vm379 = vcmp.gt.s32.totalorder %v264, 2
        %vm380 = vcmp.lt.s32.totalorder %v363, 2147483647
        %vm381 = vmand %vm379, %vm380
        %v382 = vsel %vm381, 1, 0
        %vm383 = vcmp.eq.s32.totalorder %v382, 1
        %vm384 = vmand %vm365, %vm383
        %vm385 = vmor %vm344, %vm384
        %vm386 = vcmp.eq.s32.totalorder %v235, 2
        %vm387 = vmand %vm386, %vm383
        %v388 = vsel %vm387, %v364, %v347
        %v389 = vsel %vm387, %v378, %v348
        %v390 = vsel %vm365, 2147483647, %v349
        %v391 = vand.u32 %v390, 65535
        %v392 = vshra.s32 %v390, 16
        %v393 = vcvt.s32.f32 %v391
        %v394 = vcvt.s32.f32 %v392
        %395 = vmin.xlane.f32.xlu0 %v394
        %v396 = vpop.xlane.xlu0 %395
        %vm397 = vcmp.eq.f32.partialorder %v394, %v396
        %v398 = vsel %vm397, %v393, inf
        %399 = vmin.xlane.f32.xlu0 %v398
        %v400 = vpop.xlane.xlu0 %399
        %v401 = vcvt.f32.s32 %v400
        %v402 = vcvt.f32.s32 %v396
        %v403 = vshll.u32 %v402, 16
        %v404 = vadd.s32 %v403, %v401
        %v405 = vand.u32 %v404, 127
        %vm406 = vcmp.eq.s32.totalorder %v235, %v405
        %v407 = vsel %vm406, %v236, 0
        %v408 = vand.u32 %v407, 65535
        %v409 = vshrl.u32 %v407, 16
        %v410 = vcvt.s32.f32 %v408
        %v411 = vcvt.s32.f32 %v409
        %412 = vadd.xlane.f32.xlu0 %v410
        %v413 = vpop.xlane.xlu0 %412
        %414 = vadd.xlane.f32.xlu0 %v411
        %v415 = vpop.xlane.xlu0 %414
        %v416 = vcvt.f32.s32 %v413
        %v417 = vcvt.f32.s32 %v415
        %v418 = vshll.u32 %v417, 16
        %v419 = vadd.s32 %v418, %v416
        %vm420 = vcmp.gt.s32.totalorder %v264, 3
        %vm421 = vcmp.lt.s32.totalorder %v404, 2147483647
        %vm422 = vmand %vm420, %vm421
        %v423 = vsel %vm422, 1, 0
        %vm424 = vcmp.eq.s32.totalorder %v423, 1
        %vm425 = vmand %vm406, %vm424
        %vm426 = vmor %vm385, %vm425
        %vm427 = vcmp.eq.s32.totalorder %v235, 3
        %vm428 = vmand %vm427, %vm424
        %v429 = vsel %vm428, %v405, %v388
        %v430 = vsel %vm428, %v419, %v389
        %v431 = vsel %vm406, 2147483647, %v390
        %v432 = vand.u32 %v431, 65535
        %v433 = vshra.s32 %v431, 16
        %v434 = vcvt.s32.f32 %v432
        %v435 = vcvt.s32.f32 %v433
        %436 = vmin.xlane.f32.xlu0 %v435
        %v437 = vpop.xlane.xlu0 %436
        %vm438 = vcmp.eq.f32.partialorder %v435, %v437
        %v439 = vsel %vm438, %v434, inf
        %440 = vmin.xlane.f32.xlu0 %v439
        %v441 = vpop.xlane.xlu0 %440
        %v442 = vcvt.f32.s32 %v441
        %v443 = vcvt.f32.s32 %v437
        %v444 = vshll.u32 %v443, 16
        %v445 = vadd.s32 %v444, %v442
        %v446 = vand.u32 %v445, 127
        %vm447 = vcmp.eq.s32.totalorder %v235, %v446
        %v448 = vsel %vm447, %v236, 0
        %v449 = vand.u32 %v448, 65535
        %v450 = vshrl.u32 %v448, 16
        %v451 = vcvt.s32.f32 %v449
        %v452 = vcvt.s32.f32 %v450
        %453 = vadd.xlane.f32.xlu0 %v451
        %v454 = vpop.xlane.xlu0 %453
        %455 = vadd.xlane.f32.xlu0 %v452
        %v456 = vpop.xlane.xlu0 %455
        %v457 = vcvt.f32.s32 %v454
        %v458 = vcvt.f32.s32 %v456
        %v459 = vshll.u32 %v458, 16
        %v460 = vadd.s32 %v459, %v457
        %vm461 = vcmp.gt.s32.totalorder %v264, 4
        %vm462 = vcmp.lt.s32.totalorder %v445, 2147483647
        %vm463 = vmand %vm461, %vm462
        %v464 = vsel %vm463, 1, 0
        %vm465 = vcmp.eq.s32.totalorder %v464, 1
        %vm466 = vmand %vm447, %vm465
        %vm467 = vmor %vm426, %vm466
        %vm468 = vcmp.eq.s32.totalorder %v235, 4
        %vm469 = vmand %vm468, %vm465
        %v470 = vsel %vm469, %v446, %v429
        %v471 = vsel %vm469, %v460, %v430
        %v472 = vsel %vm447, 2147483647, %v431
        %v473 = vand.u32 %v472, 65535
        %v474 = vshra.s32 %v472, 16
        %v475 = vcvt.s32.f32 %v473
        %v476 = vcvt.s32.f32 %v474
        %477 = vmin.xlane.f32.xlu0 %v476
        %v478 = vpop.xlane.xlu0 %477
        %vm479 = vcmp.eq.f32.partialorder %v476, %v478
        %v480 = vsel %vm479, %v475, inf
        %481 = vmin.xlane.f32.xlu0 %v480
        %v482 = vpop.xlane.xlu0 %481
        %v483 = vcvt.f32.s32 %v482
        %v484 = vcvt.f32.s32 %v478
        %v485 = vshll.u32 %v484, 16
        %v486 = vadd.s32 %v485, %v483
        %v487 = vand.u32 %v486, 127
        %vm488 = vcmp.eq.s32.totalorder %v235, %v487
        %v489 = vsel %vm488, %v236, 0
        %v490 = vand.u32 %v489, 65535
        %v491 = vshrl.u32 %v489, 16
        %v492 = vcvt.s32.f32 %v490
        %v493 = vcvt.s32.f32 %v491
        %494 = vadd.xlane.f32.xlu0 %v492
        %v495 = vpop.xlane.xlu0 %494
        %496 = vadd.xlane.f32.xlu0 %v493
        %v497 = vpop.xlane.xlu0 %496
        %v498 = vcvt.f32.s32 %v495
        %v499 = vcvt.f32.s32 %v497
        %v500 = vshll.u32 %v499, 16
        %v501 = vadd.s32 %v500, %v498
        %vm502 = vcmp.gt.s32.totalorder %v264, 5
        %vm503 = vcmp.lt.s32.totalorder %v486, 2147483647
        %vm504 = vmand %vm502, %vm503
        %v505 = vsel %vm504, 1, 0
        %vm506 = vcmp.eq.s32.totalorder %v505, 1
        %vm507 = vmand %vm488, %vm506
        %vm508 = vmor %vm467, %vm507
        %vm509 = vcmp.eq.s32.totalorder %v235, 5
        %vm510 = vmand %vm509, %vm506
        %v511 = vsel %vm510, %v487, %v470
        %v512 = vsel %vm510, %v501, %v471
        %v513 = vsel %vm488, 2147483647, %v472
        %v514 = vand.u32 %v513, 65535
        %v515 = vshra.s32 %v513, 16
        %v516 = vcvt.s32.f32 %v514
        %v517 = vcvt.s32.f32 %v515
        %518 = vmin.xlane.f32.xlu0 %v517
        %v519 = vpop.xlane.xlu0 %518
        %vm520 = vcmp.eq.f32.partialorder %v517, %v519
        %v521 = vsel %vm520, %v516, inf
        %522 = vmin.xlane.f32.xlu0 %v521
        %v523 = vpop.xlane.xlu0 %522
        %v524 = vcvt.f32.s32 %v523
        %v525 = vcvt.f32.s32 %v519
        %v526 = vshll.u32 %v525, 16
        %v527 = vadd.s32 %v526, %v524
        %v528 = vand.u32 %v527, 127
        %vm529 = vcmp.eq.s32.totalorder %v235, %v528
        %v530 = vsel %vm529, %v236, 0
        %v531 = vand.u32 %v530, 65535
        %v532 = vshrl.u32 %v530, 16
        %v533 = vcvt.s32.f32 %v531
        %v534 = vcvt.s32.f32 %v532
        %535 = vadd.xlane.f32.xlu0 %v533
        %v536 = vpop.xlane.xlu0 %535
        %537 = vadd.xlane.f32.xlu0 %v534
        %v538 = vpop.xlane.xlu0 %537
        %v539 = vcvt.f32.s32 %v536
        %v540 = vcvt.f32.s32 %v538
        %v541 = vshll.u32 %v540, 16
        %v542 = vadd.s32 %v541, %v539
        %vm543 = vcmp.gt.s32.totalorder %v264, 6
        %vm544 = vcmp.lt.s32.totalorder %v527, 2147483647
        %vm545 = vmand %vm543, %vm544
        %v546 = vsel %vm545, 1, 0
        %vm547 = vcmp.eq.s32.totalorder %v546, 1
        %vm548 = vmand %vm529, %vm547
        %vm549 = vmor %vm508, %vm548
        %vm550 = vcmp.eq.s32.totalorder %v235, 6
        %vm551 = vmand %vm550, %vm547
        %v552 = vsel %vm551, %v528, %v511
        %v553 = vsel %vm551, %v542, %v512
        %v554 = vsel %vm529, 2147483647, %v513
        %v555 = vand.u32 %v554, 65535
        %v556 = vshra.s32 %v554, 16
        %v557 = vcvt.s32.f32 %v555
        %v558 = vcvt.s32.f32 %v556
        %559 = vmin.xlane.f32.xlu0 %v558
        %v560 = vpop.xlane.xlu0 %559
        %vm561 = vcmp.eq.f32.partialorder %v558, %v560
        %v562 = vsel %vm561, %v557, inf
        %563 = vmin.xlane.f32.xlu0 %v562
        %v564 = vpop.xlane.xlu0 %563
        %v565 = vcvt.f32.s32 %v564
        %v566 = vcvt.f32.s32 %v560
        %v567 = vshll.u32 %v566, 16
        %v568 = vadd.s32 %v567, %v565
        %v569 = vand.u32 %v568, 127
        %vm570 = vcmp.eq.s32.totalorder %v235, %v569
        %v571 = vsel %vm570, %v236, 0
        %v572 = vand.u32 %v571, 65535
        %v573 = vshrl.u32 %v571, 16
        %v574 = vcvt.s32.f32 %v572
        %v575 = vcvt.s32.f32 %v573
        %576 = vadd.xlane.f32.xlu0 %v574
        %v577 = vpop.xlane.xlu0 %576
        %578 = vadd.xlane.f32.xlu0 %v575
        %v579 = vpop.xlane.xlu0 %578
        %v580 = vcvt.f32.s32 %v577
        %v581 = vcvt.f32.s32 %v579
        %v582 = vshll.u32 %v581, 16
        %v583 = vadd.s32 %v582, %v580
        %vm584 = vcmp.gt.s32.totalorder %v264, 7
        %vm585 = vcmp.lt.s32.totalorder %v568, 2147483647
        %vm586 = vmand %vm584, %vm585
        %v587 = vsel %vm586, 1, 0
        %vm588 = vcmp.eq.s32.totalorder %v587, 1
        %vm589 = vmand %vm570, %vm588
        %vm590 = vmor %vm549, %vm589
        %vm591 = vcmp.eq.s32.totalorder %v235, 7
        %vm592 = vmand %vm591, %vm588
        %v593 = vsel %vm592, %v569, %v552
        %v594 = vsel %vm592, %v583, %v553
        %v595 = vsel %vm570, 2147483647, %v554
        %v596 = vand.u32 %v595, 65535
        %v597 = vshra.s32 %v595, 16
        %v598 = vcvt.s32.f32 %v596
        %v599 = vcvt.s32.f32 %v597
        %600 = vmin.xlane.f32.xlu0 %v599
        %v601 = vpop.xlane.xlu0 %600
        %vm602 = vcmp.eq.f32.partialorder %v599, %v601
        %v603 = vsel %vm602, %v598, inf
        %604 = vmin.xlane.f32.xlu0 %v603
        %v605 = vpop.xlane.xlu0 %604
        %v606 = vcvt.f32.s32 %v605
        %v607 = vcvt.f32.s32 %v601
        %v608 = vshll.u32 %v607, 16
        %v609 = vadd.s32 %v608, %v606
        %v610 = vand.u32 %v609, 127
        %vm611 = vcmp.eq.s32.totalorder %v235, %v610
        %v612 = vsel %vm611, %v236, 0
        %v613 = vand.u32 %v612, 65535
        %v614 = vshrl.u32 %v612, 16
        %v615 = vcvt.s32.f32 %v613
        %v616 = vcvt.s32.f32 %v614
        %617 = vadd.xlane.f32.xlu0 %v615
        %v618 = vpop.xlane.xlu0 %617
        %619 = vadd.xlane.f32.xlu0 %v616
        %v620 = vpop.xlane.xlu0 %619
        %v621 = vcvt.f32.s32 %v618
        %v622 = vcvt.f32.s32 %v620
        %v623 = vshll.u32 %v622, 16
        %v624 = vadd.s32 %v623, %v621
        %vm625 = vcmp.gt.s32.totalorder %v264, 8
        %vm626 = vcmp.lt.s32.totalorder %v609, 2147483647
        %vm627 = vmand %vm625, %vm626
        %v628 = vsel %vm627, 1, 0
        %vm629 = vcmp.eq.s32.totalorder %v628, 1
        %vm630 = vmand %vm611, %vm629
        %vm631 = vmor %vm590, %vm630
        %vm632 = vcmp.eq.s32.totalorder %v235, 8
        %vm633 = vmand %vm632, %vm629
        %v634 = vsel %vm633, %v610, %v593
        %v635 = vsel %vm633, %v624, %v594
        %v636 = vsel %vm611, 2147483647, %v595
        %v637 = vand.u32 %v636, 65535
        %v638 = vshra.s32 %v636, 16
        %v639 = vcvt.s32.f32 %v637
        %v640 = vcvt.s32.f32 %v638
        %641 = vmin.xlane.f32.xlu0 %v640
        %v642 = vpop.xlane.xlu0 %641
        %vm643 = vcmp.eq.f32.partialorder %v640, %v642
        %v644 = vsel %vm643, %v639, inf
        %645 = vmin.xlane.f32.xlu0 %v644
        %v646 = vpop.xlane.xlu0 %645
        %v647 = vcvt.f32.s32 %v646
        %v648 = vcvt.f32.s32 %v642
        %v649 = vshll.u32 %v648, 16
        %v650 = vadd.s32 %v649, %v647
        %v651 = vand.u32 %v650, 127
        %vm652 = vcmp.eq.s32.totalorder %v235, %v651
        %v653 = vsel %vm652, %v236, 0
        %v654 = vand.u32 %v653, 65535
        %v655 = vshrl.u32 %v653, 16
        %v656 = vcvt.s32.f32 %v654
        %v657 = vcvt.s32.f32 %v655
        %658 = vadd.xlane.f32.xlu0 %v656
        %v659 = vpop.xlane.xlu0 %658
        %660 = vadd.xlane.f32.xlu0 %v657
        %v661 = vpop.xlane.xlu0 %660
        %v662 = vcvt.f32.s32 %v659
        %v663 = vcvt.f32.s32 %v661
        %v664 = vshll.u32 %v663, 16
        %v665 = vadd.s32 %v664, %v662
        %vm666 = vcmp.gt.s32.totalorder %v264, 9
        %vm667 = vcmp.lt.s32.totalorder %v650, 2147483647
        %vm668 = vmand %vm666, %vm667
        %v669 = vsel %vm668, 1, 0
        %vm670 = vcmp.eq.s32.totalorder %v669, 1
        %vm671 = vmand %vm652, %vm670
        %vm672 = vmor %vm631, %vm671
        %vm673 = vcmp.eq.s32.totalorder %v235, 9
        %vm674 = vmand %vm673, %vm670
        %v675 = vsel %vm674, %v651, %v634
        %v676 = vsel %vm674, %v665, %v635
        %v677 = vsel %vm652, 2147483647, %v636
        %v678 = vand.u32 %v677, 65535
        %v679 = vshra.s32 %v677, 16
        %v680 = vcvt.s32.f32 %v678
        %v681 = vcvt.s32.f32 %v679
        %682 = vmin.xlane.f32.xlu0 %v681
        %v683 = vpop.xlane.xlu0 %682
        %vm684 = vcmp.eq.f32.partialorder %v681, %v683
        %v685 = vsel %vm684, %v680, inf
        %686 = vmin.xlane.f32.xlu0 %v685
        %v687 = vpop.xlane.xlu0 %686
        %v688 = vcvt.f32.s32 %v687
        %v689 = vcvt.f32.s32 %v683
        %v690 = vshll.u32 %v689, 16
        %v691 = vadd.s32 %v690, %v688
        %v692 = vand.u32 %v691, 127
        %vm693 = vcmp.eq.s32.totalorder %v235, %v692
        %v694 = vsel %vm693, %v236, 0
        %v695 = vand.u32 %v694, 65535
        %v696 = vshrl.u32 %v694, 16
        %v697 = vcvt.s32.f32 %v695
        %v698 = vcvt.s32.f32 %v696
        %699 = vadd.xlane.f32.xlu0 %v697
        %v700 = vpop.xlane.xlu0 %699
        %701 = vadd.xlane.f32.xlu0 %v698
        %v702 = vpop.xlane.xlu0 %701
        %v703 = vcvt.f32.s32 %v700
        %v704 = vcvt.f32.s32 %v702
        %v705 = vshll.u32 %v704, 16
        %v706 = vadd.s32 %v705, %v703
        %vm707 = vcmp.gt.s32.totalorder %v264, 10
        %vm708 = vcmp.lt.s32.totalorder %v691, 2147483647
        %vm709 = vmand %vm707, %vm708
        %v710 = vsel %vm709, 1, 0
        %vm711 = vcmp.eq.s32.totalorder %v710, 1
        %vm712 = vmand %vm693, %vm711
        %vm713 = vmor %vm672, %vm712
        %vm714 = vcmp.eq.s32.totalorder %v235, 10
        %vm715 = vmand %vm714, %vm711
        %v716 = vsel %vm715, %v692, %v675
        %v717 = vsel %vm715, %v706, %v676
        %v718 = vsel %vm693, 2147483647, %v677
        %v719 = vand.u32 %v718, 65535
        %v720 = vshra.s32 %v718, 16
        %v721 = vcvt.s32.f32 %v719
        %v722 = vcvt.s32.f32 %v720
        %723 = vmin.xlane.f32.xlu0 %v722
        %v724 = vpop.xlane.xlu0 %723
        %vm725 = vcmp.eq.f32.partialorder %v722, %v724
        %v726 = vsel %vm725, %v721, inf
        %727 = vmin.xlane.f32.xlu0 %v726
        %v728 = vpop.xlane.xlu0 %727
        %v729 = vcvt.f32.s32 %v728
        %v730 = vcvt.f32.s32 %v724
        %v731 = vshll.u32 %v730, 16
        %v732 = vadd.s32 %v731, %v729
        %v733 = vand.u32 %v732, 127
        %vm734 = vcmp.eq.s32.totalorder %v235, %v733
        %v735 = vsel %vm734, %v236, 0
        %v736 = vand.u32 %v735, 65535
        %v737 = vshrl.u32 %v735, 16
        %v738 = vcvt.s32.f32 %v736
        %v739 = vcvt.s32.f32 %v737
        %740 = vadd.xlane.f32.xlu0 %v738
        %v741 = vpop.xlane.xlu0 %740
        %742 = vadd.xlane.f32.xlu0 %v739
        %v743 = vpop.xlane.xlu0 %742
        %v744 = vcvt.f32.s32 %v741
        %v745 = vcvt.f32.s32 %v743
        %v746 = vshll.u32 %v745, 16
        %v747 = vadd.s32 %v746, %v744
        %vm748 = vcmp.gt.s32.totalorder %v264, 11
        %vm749 = vcmp.lt.s32.totalorder %v732, 2147483647
        %vm750 = vmand %vm748, %vm749
        %v751 = vsel %vm750, 1, 0
        %vm752 = vcmp.eq.s32.totalorder %v751, 1
        %vm753 = vmand %vm734, %vm752
        %vm754 = vmor %vm713, %vm753
        %vm755 = vcmp.eq.s32.totalorder %v235, 11
        %vm756 = vmand %vm755, %vm752
        %v757 = vsel %vm756, %v733, %v716
        %v758 = vsel %vm756, %v747, %v717
        %v759 = vsel %vm734, 2147483647, %v718
        %v760 = vand.u32 %v759, 65535
        %v761 = vshra.s32 %v759, 16
        %v762 = vcvt.s32.f32 %v760
        %v763 = vcvt.s32.f32 %v761
        %764 = vmin.xlane.f32.xlu0 %v763
        %v765 = vpop.xlane.xlu0 %764
        %vm766 = vcmp.eq.f32.partialorder %v763, %v765
        %v767 = vsel %vm766, %v762, inf
        %768 = vmin.xlane.f32.xlu0 %v767
        %v769 = vpop.xlane.xlu0 %768
        %v770 = vcvt.f32.s32 %v769
        %v771 = vcvt.f32.s32 %v765
        %v772 = vshll.u32 %v771, 16
        %v773 = vadd.s32 %v772, %v770
        %v774 = vand.u32 %v773, 127
        %vm775 = vcmp.eq.s32.totalorder %v235, %v774
        %v776 = vsel %vm775, %v236, 0
        %v777 = vand.u32 %v776, 65535
        %v778 = vshrl.u32 %v776, 16
        %v779 = vcvt.s32.f32 %v777
        %v780 = vcvt.s32.f32 %v778
        %781 = vadd.xlane.f32.xlu0 %v779
        %v782 = vpop.xlane.xlu0 %781
        %783 = vadd.xlane.f32.xlu0 %v780
        %v784 = vpop.xlane.xlu0 %783
        %v785 = vcvt.f32.s32 %v782
        %v786 = vcvt.f32.s32 %v784
        %v787 = vshll.u32 %v786, 16
        %v788 = vadd.s32 %v787, %v785
        %vm789 = vcmp.gt.s32.totalorder %v264, 12
        %vm790 = vcmp.lt.s32.totalorder %v773, 2147483647
        %vm791 = vmand %vm789, %vm790
        %v792 = vsel %vm791, 1, 0
        %vm793 = vcmp.eq.s32.totalorder %v792, 1
        %vm794 = vmand %vm775, %vm793
        %vm795 = vmor %vm754, %vm794
        %vm796 = vcmp.eq.s32.totalorder %v235, 12
        %vm797 = vmand %vm796, %vm793
        %v798 = vsel %vm797, %v774, %v757
        %v799 = vsel %vm797, %v788, %v758
        %v800 = vsel %vm775, 2147483647, %v759
        %v801 = vand.u32 %v800, 65535
        %v802 = vshra.s32 %v800, 16
        %v803 = vcvt.s32.f32 %v801
        %v804 = vcvt.s32.f32 %v802
        %805 = vmin.xlane.f32.xlu0 %v804
        %v806 = vpop.xlane.xlu0 %805
        %vm807 = vcmp.eq.f32.partialorder %v804, %v806
        %v808 = vsel %vm807, %v803, inf
        %809 = vmin.xlane.f32.xlu0 %v808
        %v810 = vpop.xlane.xlu0 %809
        %v811 = vcvt.f32.s32 %v810
        %v812 = vcvt.f32.s32 %v806
        %v813 = vshll.u32 %v812, 16
        %v814 = vadd.s32 %v813, %v811
        %v815 = vand.u32 %v814, 127
        %vm816 = vcmp.eq.s32.totalorder %v235, %v815
        %v817 = vsel %vm816, %v236, 0
        %v818 = vand.u32 %v817, 65535
        %v819 = vshrl.u32 %v817, 16
        %v820 = vcvt.s32.f32 %v818
        %v821 = vcvt.s32.f32 %v819
        %822 = vadd.xlane.f32.xlu0 %v820
        %v823 = vpop.xlane.xlu0 %822
        %824 = vadd.xlane.f32.xlu0 %v821
        %v825 = vpop.xlane.xlu0 %824
        %v826 = vcvt.f32.s32 %v823
        %v827 = vcvt.f32.s32 %v825
        %v828 = vshll.u32 %v827, 16
        %v829 = vadd.s32 %v828, %v826
        %vm830 = vcmp.gt.s32.totalorder %v264, 13
        %vm831 = vcmp.lt.s32.totalorder %v814, 2147483647
        %vm832 = vmand %vm830, %vm831
        %v833 = vsel %vm832, 1, 0
        %vm834 = vcmp.eq.s32.totalorder %v833, 1
        %vm835 = vmand %vm816, %vm834
        %vm836 = vmor %vm795, %vm835
        %vm837 = vcmp.eq.s32.totalorder %v235, 13
        %vm838 = vmand %vm837, %vm834
        %v839 = vsel %vm838, %v815, %v798
        %v840 = vsel %vm838, %v829, %v799
        %v841 = vsel %vm816, 2147483647, %v800
        %v842 = vand.u32 %v841, 65535
        %v843 = vshra.s32 %v841, 16
        %v844 = vcvt.s32.f32 %v842
        %v845 = vcvt.s32.f32 %v843
        %846 = vmin.xlane.f32.xlu0 %v845
        %v847 = vpop.xlane.xlu0 %846
        %vm848 = vcmp.eq.f32.partialorder %v845, %v847
        %v849 = vsel %vm848, %v844, inf
        %850 = vmin.xlane.f32.xlu0 %v849
        %v851 = vpop.xlane.xlu0 %850
        %v852 = vcvt.f32.s32 %v851
        %v853 = vcvt.f32.s32 %v847
        %v854 = vshll.u32 %v853, 16
        %v855 = vadd.s32 %v854, %v852
        %v856 = vand.u32 %v855, 127
        %vm857 = vcmp.eq.s32.totalorder %v235, %v856
        %v858 = vsel %vm857, %v236, 0
        %v859 = vand.u32 %v858, 65535
        %v860 = vshrl.u32 %v858, 16
        %v861 = vcvt.s32.f32 %v859
        %v862 = vcvt.s32.f32 %v860
        %863 = vadd.xlane.f32.xlu0 %v861
        %v864 = vpop.xlane.xlu0 %863
        %865 = vadd.xlane.f32.xlu0 %v862
        %v866 = vpop.xlane.xlu0 %865
        %v867 = vcvt.f32.s32 %v864
        %v868 = vcvt.f32.s32 %v866
        %v869 = vshll.u32 %v868, 16
        %v870 = vadd.s32 %v869, %v867
        %vm871 = vcmp.gt.s32.totalorder %v264, 14
        %vm872 = vcmp.lt.s32.totalorder %v855, 2147483647
        %vm873 = vmand %vm871, %vm872
        %v874 = vsel %vm873, 1, 0
        %vm875 = vcmp.eq.s32.totalorder %v874, 1
        %vm876 = vmand %vm857, %vm875
        %vm877 = vmor %vm836, %vm876
        %vm878 = vcmp.eq.s32.totalorder %v235, 14
        %vm879 = vmand %vm878, %vm875
        %v880 = vsel %vm879, %v856, %v839
        %v881 = vsel %vm879, %v870, %v840
        %v882 = vsel %vm857, 2147483647, %v841
        %v883 = vand.u32 %v882, 65535
        %v884 = vshra.s32 %v882, 16
        %v885 = vcvt.s32.f32 %v883
        %v886 = vcvt.s32.f32 %v884
        %887 = vmin.xlane.f32.xlu0 %v886
        %v888 = vpop.xlane.xlu0 %887
        %vm889 = vcmp.eq.f32.partialorder %v886, %v888
        %v890 = vsel %vm889, %v885, inf
        %891 = vmin.xlane.f32.xlu0 %v890
        %v892 = vpop.xlane.xlu0 %891
        %v893 = vcvt.f32.s32 %v892
        %v894 = vcvt.f32.s32 %v888
        %v895 = vshll.u32 %v894, 16
        %v896 = vadd.s32 %v895, %v893
        %v897 = vand.u32 %v896, 127
        %vm898 = vcmp.eq.s32.totalorder %v235, %v897
        %v899 = vsel %vm898, %v236, 0
        %v900 = vand.u32 %v899, 65535
        %v901 = vshrl.u32 %v899, 16
        %v902 = vcvt.s32.f32 %v900
        %v903 = vcvt.s32.f32 %v901
        %904 = vadd.xlane.f32.xlu0 %v902
        %v905 = vpop.xlane.xlu0 %904
        %906 = vadd.xlane.f32.xlu0 %v903
        %v907 = vpop.xlane.xlu0 %906
        %v908 = vcvt.f32.s32 %v905
        %v909 = vcvt.f32.s32 %v907
        %v910 = vshll.u32 %v909, 16
        %v911 = vadd.s32 %v910, %v908
        %vm912 = vcmp.gt.s32.totalorder %v264, 15
        %vm913 = vcmp.lt.s32.totalorder %v896, 2147483647
        %vm914 = vmand %vm912, %vm913
        %v915 = vsel %vm914, 1, 0
        %vm916 = vcmp.eq.s32.totalorder %v915, 1
        %vm917 = vmand %vm898, %vm916
        %vm918 = vmor %vm877, %vm917
        %vm919 = vcmp.eq.s32.totalorder %v235, 15
        %vm920 = vmand %vm919, %vm916
        %v921 = vsel %vm920, %v897, %v880
        %v922 = vsel %vm920, %v911, %v881
        %v923 = vsel %vm898, 2147483647, %v882
        %v924 = vand.u32 %v923, 65535
        %v925 = vshra.s32 %v923, 16
        %v926 = vcvt.s32.f32 %v924
        %v927 = vcvt.s32.f32 %v925
        %928 = vmin.xlane.f32.xlu0 %v927
        %v929 = vpop.xlane.xlu0 %928
        %vm930 = vcmp.eq.f32.partialorder %v927, %v929
        %v931 = vsel %vm930, %v926, inf
        %932 = vmin.xlane.f32.xlu0 %v931
        %v933 = vpop.xlane.xlu0 %932
        %v934 = vcvt.f32.s32 %v933
        %v935 = vcvt.f32.s32 %v929
        %v936 = vshll.u32 %v935, 16
        %v937 = vadd.s32 %v936, %v934
        %v938 = vand.u32 %v937, 127
        %vm939 = vcmp.eq.s32.totalorder %v235, %v938
        %v940 = vsel %vm939, %v236, 0
        %v941 = vand.u32 %v940, 65535
        %v942 = vshrl.u32 %v940, 16
        %v943 = vcvt.s32.f32 %v941
        %v944 = vcvt.s32.f32 %v942
        %945 = vadd.xlane.f32.xlu0 %v943
        %v946 = vpop.xlane.xlu0 %945
        %947 = vadd.xlane.f32.xlu0 %v944
        %v948 = vpop.xlane.xlu0 %947
        %v949 = vcvt.f32.s32 %v946
        %v950 = vcvt.f32.s32 %v948
        %v951 = vshll.u32 %v950, 16
        %v952 = vadd.s32 %v951, %v949
        %vm953 = vcmp.gt.s32.totalorder %v264, 16
        %vm954 = vcmp.lt.s32.totalorder %v937, 2147483647
        %vm955 = vmand %vm953, %vm954
        %v956 = vsel %vm955, 1, 0
        %vm957 = vcmp.eq.s32.totalorder %v956, 1
        %vm958 = vmand %vm939, %vm957
        %vm959 = vmor %vm918, %vm958
        %vm960 = vcmp.eq.s32.totalorder %v235, 16
        %vm961 = vmand %vm960, %vm957
        %v962 = vsel %vm961, %v938, %v921
        %v963 = vsel %vm961, %v952, %v922
        %v964 = vsel %vm939, 2147483647, %v923
        %v965 = vand.u32 %v964, 65535
        %v966 = vshra.s32 %v964, 16
        %v967 = vcvt.s32.f32 %v965
        %v968 = vcvt.s32.f32 %v966
        %969 = vmin.xlane.f32.xlu0 %v968
        %v970 = vpop.xlane.xlu0 %969
        %vm971 = vcmp.eq.f32.partialorder %v968, %v970
        %v972 = vsel %vm971, %v967, inf
        %973 = vmin.xlane.f32.xlu0 %v972
        %v974 = vpop.xlane.xlu0 %973
        %v975 = vcvt.f32.s32 %v974
        %v976 = vcvt.f32.s32 %v970
        %v977 = vshll.u32 %v976, 16
        %v978 = vadd.s32 %v977, %v975
        %v979 = vand.u32 %v978, 127
        %vm980 = vcmp.eq.s32.totalorder %v235, %v979
        %v981 = vsel %vm980, %v236, 0
        %v982 = vand.u32 %v981, 65535
        %v983 = vshrl.u32 %v981, 16
        %v984 = vcvt.s32.f32 %v982
        %v985 = vcvt.s32.f32 %v983
        %986 = vadd.xlane.f32.xlu0 %v984
        %v987 = vpop.xlane.xlu0 %986
        %988 = vadd.xlane.f32.xlu0 %v985
        %v989 = vpop.xlane.xlu0 %988
        %v990 = vcvt.f32.s32 %v987
        %v991 = vcvt.f32.s32 %v989
        %v992 = vshll.u32 %v991, 16
        %v993 = vadd.s32 %v992, %v990
        %vm994 = vcmp.gt.s32.totalorder %v264, 17
        %vm995 = vcmp.lt.s32.totalorder %v978, 2147483647
        %vm996 = vmand %vm994, %vm995
        %v997 = vsel %vm996, 1, 0
        %vm998 = vcmp.eq.s32.totalorder %v997, 1
        %vm999 = vmand %vm980, %vm998
        %vm1000 = vmor %vm959, %vm999
        %vm1001 = vcmp.eq.s32.totalorder %v235, 17
        %vm1002 = vmand %vm1001, %vm998
        %v1003 = vsel %vm1002, %v979, %v962
        %v1004 = vsel %vm1002, %v993, %v963
        %v1005 = vsel %vm980, 2147483647, %v964
        %v1006 = vand.u32 %v1005, 65535
        %v1007 = vshra.s32 %v1005, 16
        %v1008 = vcvt.s32.f32 %v1006
        %v1009 = vcvt.s32.f32 %v1007
        %1010 = vmin.xlane.f32.xlu0 %v1009
        %v1011 = vpop.xlane.xlu0 %1010
        %vm1012 = vcmp.eq.f32.partialorder %v1009, %v1011
        %v1013 = vsel %vm1012, %v1008, inf
        %1014 = vmin.xlane.f32.xlu0 %v1013
        %v1015 = vpop.xlane.xlu0 %1014
        %v1016 = vcvt.f32.s32 %v1015
        %v1017 = vcvt.f32.s32 %v1011
        %v1018 = vshll.u32 %v1017, 16
        %v1019 = vadd.s32 %v1018, %v1016
        %v1020 = vand.u32 %v1019, 127
        %vm1021 = vcmp.eq.s32.totalorder %v235, %v1020
        %v1022 = vsel %vm1021, %v236, 0
        %v1023 = vand.u32 %v1022, 65535
        %v1024 = vshrl.u32 %v1022, 16
        %v1025 = vcvt.s32.f32 %v1023
        %v1026 = vcvt.s32.f32 %v1024
        %1027 = vadd.xlane.f32.xlu0 %v1025
        %v1028 = vpop.xlane.xlu0 %1027
        %1029 = vadd.xlane.f32.xlu0 %v1026
        %v1030 = vpop.xlane.xlu0 %1029
        %v1031 = vcvt.f32.s32 %v1028
        %v1032 = vcvt.f32.s32 %v1030
        %v1033 = vshll.u32 %v1032, 16
        %v1034 = vadd.s32 %v1033, %v1031
        %vm1035 = vcmp.gt.s32.totalorder %v264, 18
        %vm1036 = vcmp.lt.s32.totalorder %v1019, 2147483647
        %vm1037 = vmand %vm1035, %vm1036
        %v1038 = vsel %vm1037, 1, 0
        %vm1039 = vcmp.eq.s32.totalorder %v1038, 1
        %vm1040 = vmand %vm1021, %vm1039
        %vm1041 = vmor %vm1000, %vm1040
        %vm1042 = vcmp.eq.s32.totalorder %v235, 18
        %vm1043 = vmand %vm1042, %vm1039
        %v1044 = vsel %vm1043, %v1020, %v1003
        %v1045 = vsel %vm1043, %v1034, %v1004
        %v1046 = vsel %vm1021, 2147483647, %v1005
        %v1047 = vand.u32 %v1046, 65535
        %v1048 = vshra.s32 %v1046, 16
        %v1049 = vcvt.s32.f32 %v1047
        %v1050 = vcvt.s32.f32 %v1048
        %1051 = vmin.xlane.f32.xlu0 %v1050
        %v1052 = vpop.xlane.xlu0 %1051
        %vm1053 = vcmp.eq.f32.partialorder %v1050, %v1052
        %v1054 = vsel %vm1053, %v1049, inf
        %1055 = vmin.xlane.f32.xlu0 %v1054
        %v1056 = vpop.xlane.xlu0 %1055
        %v1057 = vcvt.f32.s32 %v1056
        %v1058 = vcvt.f32.s32 %v1052
        %v1059 = vshll.u32 %v1058, 16
        %v1060 = vadd.s32 %v1059, %v1057
        %v1061 = vand.u32 %v1060, 127
        %vm1062 = vcmp.eq.s32.totalorder %v235, %v1061
        %v1063 = vsel %vm1062, %v236, 0
        %v1064 = vand.u32 %v1063, 65535
        %v1065 = vshrl.u32 %v1063, 16
        %v1066 = vcvt.s32.f32 %v1064
        %v1067 = vcvt.s32.f32 %v1065
        %1068 = vadd.xlane.f32.xlu0 %v1066
        %v1069 = vpop.xlane.xlu0 %1068
        %1070 = vadd.xlane.f32.xlu0 %v1067
        %v1071 = vpop.xlane.xlu0 %1070
        %v1072 = vcvt.f32.s32 %v1069
        %v1073 = vcvt.f32.s32 %v1071
        %v1074 = vshll.u32 %v1073, 16
        %v1075 = vadd.s32 %v1074, %v1072
        %vm1076 = vcmp.gt.s32.totalorder %v264, 19
        %vm1077 = vcmp.lt.s32.totalorder %v1060, 2147483647
        %vm1078 = vmand %vm1076, %vm1077
        %v1079 = vsel %vm1078, 1, 0
        %vm1080 = vcmp.eq.s32.totalorder %v1079, 1
        %vm1081 = vmand %vm1062, %vm1080
        %vm1082 = vmor %vm1041, %vm1081
        %vm1083 = vcmp.eq.s32.totalorder %v235, 19
        %vm1084 = vmand %vm1083, %vm1080
        %v1085 = vsel %vm1084, %v1061, %v1044
        %v1086 = vsel %vm1084, %v1075, %v1045
        %v1087 = vsel %vm1082, 50264, %v236
        %1088 = vst [vmem:[%s223] sm:$0xff] %v1087
        %v1089 = vshll.u32 %v1085, 16
        %v1090 = vor.u32 %v1089, %v1086
        %1091 = vst [vmem:[%s233] sm:$0xff] %v1090
        %s1092 = sand.u32 %s84, 1
        %s1093 = scalar_lea.sflag [#allocation4], %s1092
        %s1094 = sand.u32 %s84, 1
        %s1095 = smul.addr %s1094, 8
        %s1096 = scalar_lea.vmem [#allocation7], %s1095
        %p1097 = scmp.lt.s32.totalorder %s24, 1
        %s1098 = scalar_select %p1097, %s24, 1
        %s1099 = smul.addr %s1098, 8
        %s1100 = scalar_lea.vmem %s3, %s1099
        // Predicated region
        $region37: #{features_mlm_forward.1} parent=27 // pred_check
          %p1101 = pneg %p94
        $region38: #{features_mlm_forward.1} parent=27 // pred_check_branch
          %1103 = sbr.rel (%p1101) target = $region40
        $region39: #{features_mlm_forward.1} parent=27 // pred_region
          %s1105 = ssub.s32 128, 128
          %1106 = vsyncadd %s1093, %s1105
          %s1107 = smul.addr %s24, 128
          %s1108 = scalar_lea.hbm %s2, %s1107
          %s1110 = sshll.u32 %s1096, 4
          %s1111 = int_to_ptr.vmem [resolvable:$true] %s1110
          %1113 = dma.vmem_to_hbm [thread:$0]  %s1111, 128, %s1108, %s1093
        $region40: #{features_mlm_forward.1} parent=27 // pred_fallthru
          _
        // Predicated region
        $region41: #{features_mlm_forward.1} parent=27 // pred_check
          %p1114 = pneg %p120
        $region42: #{features_mlm_forward.1} parent=27 // pred_check_branch
          %1116 = sbr.rel (%p1114) target = $region44
        $region43: #{features_mlm_forward.1} parent=27 // pred_region
          _
        $region44: #{features_mlm_forward.1} parent=27 // pred_fallthru
          _
      $region28: #{features_mlm_forward.1} parent=5 // pred_fallthru
        _
      %p1117 = scmp.le.s32.totalorder 2, %s19
      // Predicated region
      $region45: #{features_mlm_forward.1} parent=5 // pred_check
        %p1118 = pneg %p1117
      $region46: #{features_mlm_forward.1} parent=5 // pred_check_branch
        %1120 = sbr.rel (%p1118) target = $region48
      $region47: #{features_mlm_forward.1} parent=5 // pred_region
        %s1121 = ssub.s32 %s19, 2
        // Predicated region
        $region49: #{features_mlm_forward.1} parent=47 // pred_check
          %p1122 = pneg %p100
        $region50: #{features_mlm_forward.1} parent=47 // pred_check_branch
          %1124 = sbr.rel (%p1122) target = $region52
        $region51: #{features_mlm_forward.1} parent=47 // pred_region
          %s1125 = sand.u32 %s85, 1
          %s1126 = scalar_lea.sflag [#allocation4], %s1125
          %s1127 = sand.u32 %s85, 1
          %s1128 = smul.addr %s1127, 8
          %s1129 = scalar_lea.vmem [#allocation7], %s1128
          %1130 = dma.done %s1126, 128
        $region52: #{features_mlm_forward.1} parent=47 // pred_fallthru
          _
        // Predicated region
        $region53: #{features_mlm_forward.1} parent=47 // pred_check
          %p1131 = pneg %p126
        $region54: #{features_mlm_forward.1} parent=47 // pred_check_branch
          %1133 = sbr.rel (%p1131) target = $region56
        $region55: #{features_mlm_forward.1} parent=47 // pred_region
          %p1134 = scmp.lt.s32.totalorder %s25, 1
          %s1135 = scalar_select %p1134, %s25, 1
          %s1136 = smul.addr %s1135, 8
          %s1137 = scalar_lea.vmem %s3, %s1136
        $region56: #{features_mlm_forward.1} parent=47 // pred_fallthru
          _
      $region48: #{features_mlm_forward.1} parent=5 // pred_fallthru
        _
    $region6: #{features_mlm_forward.1} parent=1 // loop_footer
      %s23 = sadd.s32 1, %s19
    $region7: #{features_mlm_forward.1} parent=1 // loop_footer_branch
      %18 = sbr.rel target = $region3
    $region8: #{features_mlm_forward.1} parent=1 // loop_exit
      _
    %1138 = vsyncpa [#allocation3], 1
    %s1139 = scalar_lea.sflag [#allocation3], 1
    %1140 = vsyncpa %s1139, 1
    %1141 = vsyncpa [#allocation6], 1
    %s1142 = scalar_lea.sflag [#allocation6], 1
    %1143 = vsyncpa %s1142, 1
    %1144 = vsyncpa [#allocation4], 1
    %s1145 = scalar_lea.sflag [#allocation4], 1
    %1146 = vsyncpa %s1145, 1

</llo_original>
